<compile_context>
chip_gen: v6e
topology: v6e:2x2x1
jax: 0.10.0
libtpu: 0.0.40
codegen_flags: <defaults>
</compile_context>

<pallas_src>
import functools
import math

import jax
import jax.numpy as jnp
from jax.experimental import pallas as pl
from jax.experimental.pallas import tpu as pltpu


# ---------------------------------------------------------------------------
# Fused kernel
# ---------------------------------------------------------------------------
def _db_head_kernel(xm_ref, xt_ref, xb_ref, w1_ref, t1_ref, w2_ref, t2_ref,
                    w3_ref, b3_ref, o_ref, pad_ref, *, TH, W, Cin, C4):
    i = pl.program_id(1)
    n_tiles = pl.num_programs(1)
    M = TH * W

    # --- assemble H-halo'd rows in VMEM scratch (halo rows masked at edges) --
    top_ok = jnp.where(i > 0, 1.0, 0.0)
    bot_ok = jnp.where(i < n_tiles - 1, 1.0, 0.0)
    pad_ref[0] = xt_ref[0, 0] * top_ok
    pad_ref[1:TH + 1] = xm_ref[0]
    pad_ref[TH + 1] = xb_ref[0, 0] * bot_ok

    # --- stage 1: 3x3 conv (BN scale folded into weights) + shift + ReLU -----
    # w1_ref[dy] is (Cin, 3*C4) with the 3 dx taps packed along columns; the
    # whole conv is 3 MXU matmuls (one per dy).
    acc = jnp.dot(pad_ref[0:TH].reshape(M, Cin), w1_ref[0],
                  preferred_element_type=jnp.float32)
    for dy in (1, 2):
        acc = acc + jnp.dot(pad_ref[dy:dy + TH].reshape(M, Cin), w1_ref[dy],
                            preferred_element_type=jnp.float32)

    a_left = acc[:, 0:C4]            # tap dx=0, needs value at column w-1
    a_mid = acc[:, C4:2 * C4]        # tap dx=1
    a_right = acc[:, 2 * C4:3 * C4]  # tap dx=2, needs value at column w+1

    # (M, 1) column-index mask, broadcast against the (M, C4) rolled taps.
    w_idx = jax.lax.broadcasted_iota(jnp.int32, (TH, W, 1), 1).reshape(M, 1)
    left = jnp.where(w_idx == 0, 0.0, pltpu.roll(a_left, shift=1, axis=0))
    right = jnp.where(w_idx == W - 1, 0.0,
                      pltpu.roll(a_right, shift=M - 1, axis=0))
    y1 = jnp.maximum(a_mid + left + right + t1_ref[...], 0.0)      # (M, C4)

    # --- stage 2: deconv 2x2/s2, 4 taps packed into one matmul, BN + ReLU ----
    y2 = jnp.dot(y1, w2_ref[...], preferred_element_type=jnp.float32)
    y2 = jnp.maximum(y2 + t2_ref[...], 0.0)                        # (M, 4*C4)

    # --- stage 3: deconv 2x2/s2 -> 1 ch (block-diag packed) + sigmoid --------
    y3 = jnp.dot(y2, w3_ref[...], preferred_element_type=jnp.float32)
    y3 = jax.nn.sigmoid(y3 + b3_ref[...])                          # (M, 16)

    # column index = 8a + 4b + 2e + f  (final pixel (4h+2a+e, 4w+2b+f))
    o_ref[0] = y3.reshape(TH, W, 16)


# ---------------------------------------------------------------------------
# Tiling helpers
# ---------------------------------------------------------------------------
def _per_step_vmem_bytes(TH, W, Cin, C4):
    f = 4
    m = TH * W
    io = 2 * (m * Cin + 2 * W * Cin + m * 16) * f                    # blocks (x2 buf)
    wgt = 2 * (3 * Cin * 3 * C4 + C4 * 4 * C4 + 4 * C4 * 16 + 6 * C4 + 16) * f
    scr = (TH + 2) * W * Cin * f                                     # halo scratch
    live = m * (3 * C4 + C4 + 4 * C4 + 16) * f                       # acc/y1/y2/y3
    return io + wgt + scr + live


def _choose_row_tile(H, W, Cin, C4, budget=12 * 1024 * 1024):
    best = 1
    for th in range(1, H + 1):
        if H % th == 0 and _per_step_vmem_bytes(th, W, Cin, C4) <= budget:
            best = th
    return best


# ---------------------------------------------------------------------------
# Wrapper
# ---------------------------------------------------------------------------
def db_head_forward(fused, x_nhwc, row_tile=None):
    N, H, W, Cin = x_nhwc.shape
    C4 = fused['t1'].shape[-1]
    TH = row_tile if row_tile is not None else _choose_row_tile(H, W, Cin, C4)
    assert H % TH == 0, (H, TH)
    n_tiles = H // TH

    kernel = functools.partial(_db_head_kernel, TH=TH, W=W, Cin=Cin, C4=C4)
    vmem_limit = int(min(48 * 1024 * 1024,
                         max(16 * 1024 * 1024,
                             2 * _per_step_vmem_bytes(TH, W, Cin, C4))))

    # Advisory cost hint for the XLA scheduler around the custom call.
    flops = 2 * N * H * W * (Cin * 9 * C4 + C4 * 4 * C4 + 4 * C4 * 16)
    bytes_accessed = 4 * (N * H * W * (Cin + 16)
                          + 3 * Cin * 3 * C4 + C4 * 4 * C4 + 4 * C4 * 16
                          + 6 * C4 + 16)
    cost = pl.CostEstimate(flops=int(flops),
                           transcendentals=int(N * H * W * 16),
                           bytes_accessed=int(bytes_accessed))

    out16 = pl.pallas_call(
        kernel,
        out_shape=jax.ShapeDtypeStruct((N, H, W, 16), jnp.float32),
        grid=(N, n_tiles),
        in_specs=[
            # main row tile
            pl.BlockSpec((1, TH, W, Cin), lambda n, i: (n, i, 0, 0)),
            # one-row top / bottom halos (clamped at the image border,
            # masked to zero in-kernel)
            pl.BlockSpec((1, 1, W, Cin),
                         lambda n, i: (n, jnp.maximum(i * TH - 1, 0), 0, 0)),
            pl.BlockSpec((1, 1, W, Cin),
                         lambda n, i: (n, jnp.minimum((i + 1) * TH, H - 1), 0, 0)),
            # fused / packed weights (constant index_map -> fetched once)
            pl.BlockSpec((3, Cin, 3 * C4), lambda n, i: (0, 0, 0)),
            pl.BlockSpec((1, C4), lambda n, i: (0, 0)),
            pl.BlockSpec((C4, 4 * C4), lambda n, i: (0, 0)),
            pl.BlockSpec((1, 4 * C4), lambda n, i: (0, 0)),
            pl.BlockSpec((4 * C4, 16), lambda n, i: (0, 0)),
            pl.BlockSpec((1, 16), lambda n, i: (0, 0)),
        ],
        out_specs=pl.BlockSpec((1, TH, W, 16), lambda n, i: (n, i, 0, 0)),
        scratch_shapes=[pltpu.VMEM((TH + 2, W, Cin), jnp.float32)],
        compiler_params=pltpu.CompilerParams(
            dimension_semantics=("parallel", "parallel"),
            vmem_limit_bytes=vmem_limit),
        cost_estimate=cost,
    )(x_nhwc, x_nhwc, x_nhwc,
      fused['w1p'], fused['t1'], fused['w2p'], fused['t2'],
      fused['w3p'], fused['b3'])

    # Interleave the 16 deconv phases into the final probability map.
    # out16[n, h, w, 8a+4b+2e+f] -> out[n, 0, 4h+2a+e, 4w+2b+f]
    y = out16.reshape(N, H, W, 2, 2, 2, 2)
    y = jnp.transpose(y, (0, 1, 3, 5, 2, 4, 6))
    return y.reshape(N, 1, 4 * H, 4 * W)


# ---------------------------------------------------------------------------
# Parameters
# ---------------------------------------------------------------------------
def init_params(key, in_channels):
    c4 = in_channels // 4
    ks = jax.random.split(key, 16)

    def kaiming_uniform(k, shape, fan_in):
        bound = math.sqrt(6.0 / fan_in)
        return jax.random.uniform(k, shape, jnp.float32, -bound, bound)

    return dict(
        w1=kaiming_uniform(ks[0], (3, 3, in_channels, c4), 9 * in_channels),
        b1=jnp.zeros((c4,), jnp.float32),
        g1=1.0 + 0.1 * jax.random.normal(ks[1], (c4,), jnp.float32),
        be1=0.1 * jax.random.normal(ks[2], (c4,), jnp.float32),
        m1=0.1 * jax.random.normal(ks[3], (c4,), jnp.float32),
        v1=jnp.abs(jax.random.normal(ks[4], (c4,), jnp.float32)) + 0.5,
        w2=kaiming_uniform(ks[5], (2, 2, c4, c4), 4 * c4),
        b2=0.05 * jax.random.normal(ks[6], (c4,), jnp.float32),
        g2=1.0 + 0.1 * jax.random.normal(ks[7], (c4,), jnp.float32),
        be2=0.1 * jax.random.normal(ks[8], (c4,), jnp.float32),
        m2=0.1 * jax.random.normal(ks[9], (c4,), jnp.float32),
        v2=jnp.abs(jax.random.normal(ks[10], (c4,), jnp.float32)) + 0.5,
        w3=kaiming_uniform(ks[11], (2, 2, c4, 1), 4 * c4),
        b3=0.05 * jax.random.normal(ks[12], (1,), jnp.float32),
    )


def fuse_params(raw, eps=1e-5):
    cin = raw['w1'].shape[2]
    c4 = raw['w1'].shape[-1]
    s1 = raw['g1'] / jnp.sqrt(raw['v1'] + eps)
    t1 = raw['be1'] - raw['m1'] * s1 + raw['b1'] * s1
    s2 = raw['g2'] / jnp.sqrt(raw['v2'] + eps)
    t2 = raw['be2'] - raw['m2'] * s2 + raw['b2'] * s2

    # conv1: fold BN scale into weights, pack the 3 dx taps along columns:
    #   w1p[dy, ci, dx*C4 + co] = w1[dy, dx, ci, co] * s1[co]
    w1s = raw['w1'] * s1
    w1p = jnp.transpose(w1s, (0, 2, 1, 3)).reshape(3, cin, 3 * c4)

    # deconv1: fold BN scale, pack the 4 (a,b) taps along columns:
    #   w2p[ci, (2a+b)*C4 + co] = w2[a, b, ci, co] * s2[co]
    w2s = raw['w2'] * s2
    w2p = jnp.transpose(w2s, (2, 0, 1, 3)).reshape(c4, 4 * c4)
    t2p = jnp.tile(t2, 4)

    # deconv2 -> 1 channel: block-diagonal so a single matmul emits all
    # 16 output phases: w3p[(2a+b)*C4 + c, (2a+b)*4 + (2e+f)] = w3[e, f, c, 0]
    w3r = jnp.transpose(raw['w3'][..., 0], (2, 0, 1)).reshape(c4, 4)
    w3p = jnp.zeros((4 * c4, 16), jnp.float32)
    for g in range(4):
        w3p = w3p.at[g * c4:(g + 1) * c4, g * 4:(g + 1) * 4].set(w3r)
    b3p = jnp.broadcast_to(raw['b3'], (16,)).reshape(1, 16)

    return dict(w1p=w1p, t1=t1[None, :], w2p=w2p, t2=t2p[None, :],
                w3p=w3p, b3=b3p)


# ---------------------------------------------------------------------------
# Pure-JAX reference (correctness check)
# ---------------------------------------------------------------------------
def _deconv_ref(x, w, b):
    N, H, W, Cin = x.shape
    Cout = w.shape[-1]
    t = jnp.einsum('nhwc,abcd->nhawbd', x, w,
                   precision=jax.lax.Precision.HIGHEST)
    return t.reshape(N, 2 * H, 2 * W, Cout) + b


def head_reference(raw, x_nhwc, eps=1e-5):
    y = jax.lax.conv_general_dilated(
        x_nhwc, raw['w1'], (1, 1), 'SAME',
        dimension_numbers=('NHWC', 'HWIO', 'NHWC'),
        precision=jax.lax.Precision.HIGHEST) + raw['b1']
    y = (y - raw['m1']) / jnp.sqrt(raw['v1'] + eps) * raw['g1'] + raw['be1']
    y = jnp.maximum(y, 0.0)
    y = _deconv_ref(y, raw['w2'], raw['b2'])
    y = (y - raw['m2']) / jnp.sqrt(raw['v2'] + eps) * raw['g2'] + raw['be2']
    y = jnp.maximum(y, 0.0)
    y = _deconv_ref(y, raw['w3'], raw['b3'])
    y = jax.nn.sigmoid(y)
    return jnp.transpose(y, (0, 3, 1, 2))  # -> NCHW


# ---------------------------------------------------------------------------
if __name__ == "__main__":
    key = jax.random.PRNGKey(0)
    kx, kp = jax.random.split(key)

    N, in_channels, H, W = 2, 16, 16, 16
    x_nchw = jax.random.normal(kx, (N, in_channels, H, W), jnp.float32)
    x_nhwc = jnp.transpose(x_nchw, (0, 2, 3, 1))

    raw = init_params(kp, in_channels)
    fused = fuse_params(raw)

    # row_tile=8 -> 2 row tiles per image, exercising the halo masking paths.
    fwd = jax.jit(functools.partial(db_head_forward, row_tile=8))
    out = jax.block_until_ready(fwd(fused, x_nhwc))

    assert out.shape == (N, 1, 4 * H, 4 * W), out.shape

    ref = head_reference(raw, x_nhwc)
    err = float(jnp.max(jnp.abs(out - ref)))
    assert err < 2e-3, err

    print("KERNEL_OK")
</pallas_src>

<mosaic_0001>
module attributes {stable_mosaic.version = 11 : i64} {
  func.func @_db_head_kernel(%arg0: i32, %arg1: i32, %arg2: memref<1x8x16x16xf32, #tpu.memory_space<vmem>>, %arg3: memref<1x1x16x16xf32, #tpu.memory_space<vmem>>, %arg4: memref<1x1x16x16xf32, #tpu.memory_space<vmem>>, %arg5: memref<3x16x12xf32, #tpu.memory_space<vmem>>, %arg6: memref<1x4xf32, #tpu.memory_space<vmem>>, %arg7: memref<4x16xf32, #tpu.memory_space<vmem>>, %arg8: memref<1x16xf32, #tpu.memory_space<vmem>>, %arg9: memref<16x16xf32, #tpu.memory_space<vmem>>, %arg10: memref<1x16xf32, #tpu.memory_space<vmem>>, %arg11: memref<1x8x16x16xf32, #tpu.memory_space<vmem>>, %arg12: memref<10x16x16xf32, #tpu.memory_space<vmem>>) attributes {dimension_semantics = [#tpu.dimension_semantics<parallel>, #tpu.dimension_semantics<parallel>], iteration_bounds = array<i64: 2, 2>, scalar_prefetch = 0 : i64, scratch_operands = 1 : i64, tpu.core_type = #tpu.core_type<tc>, window_params = [{transform_indices = @transform_0, window_bounds = array<i64: 1, 8, 16, 16>}, {transform_indices = @transform_1, window_bounds = array<i64: 1, 1, 16, 16>}, {transform_indices = @transform_2, window_bounds = array<i64: 1, 1, 16, 16>}, {pipeline_mode = #tpu.pipeline_mode<synchronous>, transform_indices = @transform_3, window_bounds = array<i64: 3, 16, 12>}, {pipeline_mode = #tpu.pipeline_mode<synchronous>, transform_indices = @transform_4, window_bounds = array<i64: 1, 4>}, {pipeline_mode = #tpu.pipeline_mode<synchronous>, transform_indices = @transform_5, window_bounds = array<i64: 4, 16>}, {pipeline_mode = #tpu.pipeline_mode<synchronous>, transform_indices = @transform_6, window_bounds = array<i64: 1, 16>}, {pipeline_mode = #tpu.pipeline_mode<synchronous>, transform_indices = @transform_7, window_bounds = array<i64: 16, 16>}, {pipeline_mode = #tpu.pipeline_mode<synchronous>, transform_indices = @transform_8, window_bounds = array<i64: 1, 16>}, {transform_indices = @transform_9, window_bounds = array<i64: 1, 8, 16, 16>}]} {
    %c0_i32 = arith.constant 0 : i32
    %0 = arith.cmpi sgt, %arg1, %c0_i32 : i32
    %cst = arith.constant 1.000000e+00 : f32
    %cst_0 = arith.constant 0.000000e+00 : f32
    %1 = arith.select %0, %cst, %cst_0 : f32
    %c1_i32 = arith.constant 1 : i32
    %2 = arith.cmpi slt, %arg1, %c1_i32 : i32
    %cst_1 = arith.constant 1.000000e+00 : f32
    %cst_2 = arith.constant 0.000000e+00 : f32
    %3 = arith.select %2, %cst_1, %cst_2 : f32
    %c0 = arith.constant 0 : index
    %c0_3 = arith.constant 0 : index
    %c0_4 = arith.constant 0 : index
    %c0_5 = arith.constant 0 : index
    %4 = vector.load %arg3[%c0, %c0_3, %c0_4, %c0_5] : memref<1x1x16x16xf32, #tpu.memory_space<vmem>>, vector<1x1x16x16xf32>
    %5 = vector.shape_cast %4 : vector<1x1x16x16xf32> to vector<16x16xf32>
    %6 = vector.broadcast %1 : f32 to vector<16x16xf32>
    %7 = arith.mulf %5, %6 : vector<16x16xf32>
    %c0_6 = arith.constant 0 : index
    %c0_7 = arith.constant 0 : index
    %c0_8 = arith.constant 0 : index
    %8 = vector.load %arg12[%c0_6, %c0_7, %c0_8] : memref<10x16x16xf32, #tpu.memory_space<vmem>>, vector<1x16x16xf32>
    %9 = vector.shape_cast %8 : vector<1x16x16xf32> to vector<16x16xf32>
    %10 = vector.shape_cast %7 : vector<16x16xf32> to vector<1x16x16xf32>
    tpu.vector_store %arg12[%c0_6, %c0_7, %c0_8], %10 {strides = array<i32>} : memref<10x16x16xf32, #tpu.memory_space<vmem>>, vector<1x16x16xf32>,
    %c0_9 = arith.constant 0 : index
    %c0_10 = arith.constant 0 : index
    %c0_11 = arith.constant 0 : index
    %c0_12 = arith.constant 0 : index
    %11 = vector.load %arg2[%c0_9, %c0_10, %c0_11, %c0_12] : memref<1x8x16x16xf32, #tpu.memory_space<vmem>>, vector<1x8x16x16xf32>
    %12 = vector.shape_cast %11 : vector<1x8x16x16xf32> to vector<8x16x16xf32>
    %c1 = arith.constant 1 : index
    %c0_13 = arith.constant 0 : index
    %c0_14 = arith.constant 0 : index
    %13 = vector.load %arg12[%c1, %c0_13, %c0_14] : memref<10x16x16xf32, #tpu.memory_space<vmem>>, vector<8x16x16xf32>
    tpu.vector_store %arg12[%c1, %c0_13, %c0_14], %12 {strides = array<i32>} : memref<10x16x16xf32, #tpu.memory_space<vmem>>, vector<8x16x16xf32>,
    %c0_15 = arith.constant 0 : index
    %c0_16 = arith.constant 0 : index
    %c0_17 = arith.constant 0 : index
    %c0_18 = arith.constant 0 : index
    %14 = vector.load %arg4[%c0_15, %c0_16, %c0_17, %c0_18] : memref<1x1x16x16xf32, #tpu.memory_space<vmem>>, vector<1x1x16x16xf32>
    %15 = vector.shape_cast %14 : vector<1x1x16x16xf32> to vector<16x16xf32>
    %16 = vector.broadcast %3 : f32 to vector<16x16xf32>
    %17 = arith.mulf %15, %16 : vector<16x16xf32>
    %c9 = arith.constant 9 : index
    %c0_19 = arith.constant 0 : index
    %c0_20 = arith.constant 0 : index
    %18 = vector.load %arg12[%c9, %c0_19, %c0_20] : memref<10x16x16xf32, #tpu.memory_space<vmem>>, vector<1x16x16xf32>
    %19 = vector.shape_cast %18 : vector<1x16x16xf32> to vector<16x16xf32>
    %20 = vector.shape_cast %17 : vector<16x16xf32> to vector<1x16x16xf32>
    tpu.vector_store %arg12[%c9, %c0_19, %c0_20], %20 {strides = array<i32>} : memref<10x16x16xf32, #tpu.memory_space<vmem>>, vector<1x16x16xf32>,
    %c0_21 = arith.constant 0 : index
    %c0_22 = arith.constant 0 : index
    %c0_23 = arith.constant 0 : index
    %21 = vector.load %arg12[%c0_21, %c0_22, %c0_23] : memref<10x16x16xf32, #tpu.memory_space<vmem>>, vector<8x16x16xf32>
    %22 = vector.shape_cast %21 : vector<8x16x16xf32> to vector<128x16xf32>
    %c0_24 = arith.constant 0 : index
    %c0_25 = arith.constant 0 : index
    %c0_26 = arith.constant 0 : index
    %23 = vector.load %arg5[%c0_24, %c0_25, %c0_26] : memref<3x16x12xf32, #tpu.memory_space<vmem>>, vector<1x16x12xf32>
    %24 = vector.shape_cast %23 : vector<1x16x12xf32> to vector<16x12xf32>
    %cst_27 = arith.constant dense<0.000000e+00> : vector<128x12xf32>
    %25 = tpu.matmul %22, %24, %cst_27 {dimension_numbers = #tpu.dot_dimension_numbers<[1], [0], [0], [1], [0, 0, 1, 1], [], []>} : vector<128x16xf32>, vector<16x12xf32>, vector<128x12xf32> -> vector<128x12xf32>
    %c1_28 = arith.constant 1 : index
    %c0_29 = arith.constant 0 : index
    %c0_30 = arith.constant 0 : index
    %26 = vector.load %arg12[%c1_28, %c0_29, %c0_30] : memref<10x16x16xf32, #tpu.memory_space<vmem>>, vector<8x16x16xf32>
    %27 = vector.shape_cast %26 : vector<8x16x16xf32> to vector<128x16xf32>
    %c1_31 = arith.constant 1 : index
    %c0_32 = arith.constant 0 : index
    %c0_33 = arith.constant 0 : index
    %28 = vector.load %arg5[%c1_31, %c0_32, %c0_33] : memref<3x16x12xf32, #tpu.memory_space<vmem>>, vector<1x16x12xf32>
    %29 = vector.shape_cast %28 : vector<1x16x12xf32> to vector<16x12xf32>
    %cst_34 = arith.constant dense<0.000000e+00> : vector<128x12xf32>
    %30 = tpu.matmul %27, %29, %cst_34 {dimension_numbers = #tpu.dot_dimension_numbers<[1], [0], [0], [1], [0, 0, 1, 1], [], []>} : vector<128x16xf32>, vector<16x12xf32>, vector<128x12xf32> -> vector<128x12xf32>
    %31 = arith.addf %25, %30 : vector<128x12xf32>
    %c2 = arith.constant 2 : index
    %c0_35 = arith.constant 0 : index
    %c0_36 = arith.constant 0 : index
    %32 = vector.load %arg12[%c2, %c0_35, %c0_36] : memref<10x16x16xf32, #tpu.memory_space<vmem>>, vector<8x16x16xf32>
    %33 = vector.shape_cast %32 : vector<8x16x16xf32> to vector<128x16xf32>
    %c2_37 = arith.constant 2 : index
    %c0_38 = arith.constant 0 : index
    %c0_39 = arith.constant 0 : index
    %34 = vector.load %arg5[%c2_37, %c0_38, %c0_39] : memref<3x16x12xf32, #tpu.memory_space<vmem>>, vector<1x16x12xf32>
    %35 = vector.shape_cast %34 : vector<1x16x12xf32> to vector<16x12xf32>
    %cst_40 = arith.constant dense<0.000000e+00> : vector<128x12xf32>
    %36 = tpu.matmul %33, %35, %cst_40 {dimension_numbers = #tpu.dot_dimension_numbers<[1], [0], [0], [1], [0, 0, 1, 1], [], []>} : vector<128x16xf32>, vector<16x12xf32>, vector<128x12xf32> -> vector<128x12xf32>
    %37 = arith.addf %31, %36 : vector<128x12xf32>
    %38 = vector.extract_strided_slice %37 {offsets = [0, 0], sizes = [128, 4], strides = [1, 1]} : vector<128x12xf32> to vector<128x4xf32>
    %39 = vector.extract_strided_slice %37 {offsets = [0, 4], sizes = [128, 4], strides = [1, 1]} : vector<128x12xf32> to vector<128x4xf32>
    %40 = vector.extract_strided_slice %37 {offsets = [0, 8], sizes = [128, 4], strides = [1, 1]} : vector<128x12xf32> to vector<128x4xf32>
    %41 = tpu.iota {dimensions = array<i32: 1>} : vector<8x16x1xi32>
    %42 = vector.shape_cast %41 : vector<8x16x1xi32> to vector<128x1xi32>
    %c0_i32_41 = arith.constant 0 : i32
    %43 = vector.broadcast %c0_i32_41 : i32 to vector<128x1xi32>
    %44 = arith.cmpi eq, %42, %43 : vector<128x1xi32>
    %c1_i32_42 = arith.constant 1 : i32
    %45 = tpu.dynamic_rotate %38 by %c1_i32_42 dim 0 : vector<128x4xf32>, i32 -> vector<128x4xf32>
    %cst_43 = arith.constant 0.000000e+00 : f32
    %46 = vector.shape_cast %44 : vector<128x1xi1> to vector<128x1xi1>
    %47 = vector.broadcast %46 : vector<128x1xi1> to vector<128x4xi1>
    %48 = vector.broadcast %cst_43 : f32 to vector<128x4xf32>
    %49 = arith.select %47, %48, %45 : vector<128x4xi1>, vector<128x4xf32>
    %c15_i32 = arith.constant 15 : i32
    %50 = vector.broadcast %c15_i32 : i32 to vector<128x1xi32>
    %51 = arith.cmpi eq, %42, %50 : vector<128x1xi32>
    %c127_i32 = arith.constant 127 : i32
    %52 = tpu.dynamic_rotate %40 by %c127_i32 dim 0 : vector<128x4xf32>, i32 -> vector<128x4xf32>
    %cst_44 = arith.constant 0.000000e+00 : f32
    %53 = vector.shape_cast %51 : vector<128x1xi1> to vector<128x1xi1>
    %54 = vector.broadcast %53 : vector<128x1xi1> to vector<128x4xi1>
    %55 = vector.broadcast %cst_44 : f32 to vector<128x4xf32>
    %56 = arith.select %54, %55, %52 : vector<128x4xi1>, vector<128x4xf32>
    %57 = arith.addf %39, %49 : vector<128x4xf32>
    %58 = arith.addf %57, %56 : vector<128x4xf32>
    %c0_45 = arith.constant 0 : index
    %c0_46 = arith.constant 0 : index
    %59 = vector.load %arg6[%c0_45, %c0_46] : memref<1x4xf32, #tpu.memory_space<vmem>>, vector<1x4xf32>
    %60 = vector.broadcast %59 : vector<1x4xf32> to vector<128x4xf32>
    %61 = arith.addf %58, %60 : vector<128x4xf32>
    %cst_47 = arith.constant 0.000000e+00 : f32
    %62 = vector.broadcast %cst_47 : f32 to vector<128x4xf32>
    %63 = arith.maximumf %61, %62 : vector<128x4xf32>
    %c0_48 = arith.constant 0 : index
    %c0_49 = arith.constant 0 : index
    %64 = vector.load %arg7[%c0_48, %c0_49] : memref<4x16xf32, #tpu.memory_space<vmem>>, vector<4x16xf32>
    %cst_50 = arith.constant dense<0.000000e+00> : vector<128x16xf32>
    %65 = tpu.matmul %63, %64, %cst_50 {dimension_numbers = #tpu.dot_dimension_numbers<[1], [0], [0], [1], [0, 0, 1, 1], [], []>} : vector<128x4xf32>, vector<4x16xf32>, vector<128x16xf32> -> vector<128x16xf32>
    %c0_51 = arith.constant 0 : index
    %c0_52 = arith.constant 0 : index
    %66 = vector.load %arg8[%c0_51, %c0_52] : memref<1x16xf32, #tpu.memory_space<vmem>>, vector<1x16xf32>
    %67 = vector.broadcast %66 : vector<1x16xf32> to vector<128x16xf32>
    %68 = arith.addf %65, %67 : vector<128x16xf32>
    %cst_53 = arith.constant 0.000000e+00 : f32
    %69 = vector.broadcast %cst_53 : f32 to vector<128x16xf32>
    %70 = arith.maximumf %68, %69 : vector<128x16xf32>
    %c0_54 = arith.constant 0 : index
    %c0_55 = arith.constant 0 : index
    %71 = vector.load %arg9[%c0_54, %c0_55] : memref<16x16xf32, #tpu.memory_space<vmem>>, vector<16x16xf32>
    %cst_56 = arith.constant dense<0.000000e+00> : vector<128x16xf32>
    %72 = tpu.matmul %70, %71, %cst_56 {dimension_numbers = #tpu.dot_dimension_numbers<[1], [0], [0], [1], [0, 0, 1, 1], [], []>} : vector<128x16xf32>, vector<16x16xf32>, vector<128x16xf32> -> vector<128x16xf32>
    %c0_57 = arith.constant 0 : index
    %c0_58 = arith.constant 0 : index
    %73 = vector.load %arg10[%c0_57, %c0_58] : memref<1x16xf32, #tpu.memory_space<vmem>>, vector<1x16xf32>
    %74 = vector.broadcast %73 : vector<1x16xf32> to vector<128x16xf32>
    %75 = arith.addf %72, %74 : vector<128x16xf32>
    %76 = arith.negf %75 : vector<128x16xf32>
    %77 = math.exp %76 : vector<128x16xf32>
    %cst_59 = arith.constant 1.000000e+00 : f32
    %78 = vector.broadcast %cst_59 : f32 to vector<128x16xf32>
    %79 = arith.addf %78, %77 : vector<128x16xf32>
    %80 = arith.divf %78, %79 : vector<128x16xf32>
    %81 = vector.shape_cast %80 : vector<128x16xf32> to vector<8x16x16xf32>
    %c0_60 = arith.constant 0 : index
    %c0_61 = arith.constant 0 : index
    %c0_62 = arith.constant 0 : index
    %c0_63 = arith.constant 0 : index
    %82 = vector.load %arg11[%c0_60, %c0_61, %c0_62, %c0_63] : memref<1x8x16x16xf32, #tpu.memory_space<vmem>>, vector<1x8x16x16xf32>
    %83 = vector.shape_cast %82 : vector<1x8x16x16xf32> to vector<8x16x16xf32>
    %84 = vector.shape_cast %81 : vector<8x16x16xf32> to vector<1x8x16x16xf32>
    tpu.vector_store %arg11[%c0_60, %c0_61, %c0_62, %c0_63], %84 {strides = array<i32>} : memref<1x8x16x16xf32, #tpu.memory_space<vmem>>, vector<1x8x16x16xf32>,
    return
  }
  func.func @transform_0(%arg0: i32, %arg1: i32) -> (i32, i32, i32, i32) {
    %c0_i32 = arith.constant 0 : i32
    %c0_i32_0 = arith.constant 0 : i32
    %c0_i32_1 = arith.constant 0 : i32
    return %arg0, %arg1, %c0_i32, %c0_i32_0 : i32, i32, i32, i32
  }
  func.func @transform_1(%arg0: i32, %arg1: i32) -> (i32, i32, i32, i32) {
    %c8_i32 = arith.constant 8 : i32
    %0 = arith.muli %arg1, %c8_i32 : i32
    %c1_i32 = arith.constant 1 : i32
    %1 = arith.subi %0, %c1_i32 : i32
    %c0_i32 = arith.constant 0 : i32
    %2 = arith.maxsi %1, %c0_i32 : i32
    %c0_i32_0 = arith.constant 0 : i32
    %c0_i32_1 = arith.constant 0 : i32
    %c0_i32_2 = arith.constant 0 : i32
    return %arg0, %2, %c0_i32_0, %c0_i32_1 : i32, i32, i32, i32
  }
  func.func @transform_2(%arg0: i32, %arg1: i32) -> (i32, i32, i32, i32) {
    %c1_i32 = arith.constant 1 : i32
    %0 = arith.addi %arg1, %c1_i32 : i32
    %c8_i32 = arith.constant 8 : i32
    %1 = arith.muli %0, %c8_i32 : i32
    %c15_i32 = arith.constant 15 : i32
    %2 = arith.minsi %1, %c15_i32 : i32
    %c0_i32 = arith.constant 0 : i32
    %c0_i32_0 = arith.constant 0 : i32
    %c0_i32_1 = arith.constant 0 : i32
    return %arg0, %2, %c0_i32, %c0_i32_0 : i32, i32, i32, i32
  }
  func.func @transform_3(%arg0: i32, %arg1: i32) -> (i32, i32, i32) {
    %c0_i32 = arith.constant 0 : i32
    %c0_i32_0 = arith.constant 0 : i32
    %c0_i32_1 = arith.constant 0 : i32
    %c0_i32_2 = arith.constant 0 : i32
    return %c0_i32, %c0_i32_0, %c0_i32_1 : i32, i32, i32
  }
  func.func @transform_4(%arg0: i32, %arg1: i32) -> (i32, i32) {
    %c0_i32 = arith.constant 0 : i32
    %c0_i32_0 = arith.constant 0 : i32
    %c0_i32_1 = arith.constant 0 : i32
    return %c0_i32, %c0_i32_0 : i32, i32
  }
  func.func @transform_5(%arg0: i32, %arg1: i32) -> (i32, i32) {
    %c0_i32 = arith.constant 0 : i32
    %c0_i32_0 = arith.constant 0 : i32
    %c0_i32_1 = arith.constant 0 : i32
    return %c0_i32, %c0_i32_0 : i32, i32
  }
  func.func @transform_6(%arg0: i32, %arg1: i32) -> (i32, i32) {
    %c0_i32 = arith.constant 0 : i32
    %c0_i32_0 = arith.constant 0 : i32
    %c0_i32_1 = arith.constant 0 : i32
    return %c0_i32, %c0_i32_0 : i32, i32
  }
  func.func @transform_7(%arg0: i32, %arg1: i32) -> (i32, i32) {
    %c0_i32 = arith.constant 0 : i32
    %c0_i32_0 = arith.constant 0 : i32
    %c0_i32_1 = arith.constant 0 : i32
    return %c0_i32, %c0_i32_0 : i32, i32
  }
  func.func @transform_8(%arg0: i32, %arg1: i32) -> (i32, i32) {
    %c0_i32 = arith.constant 0 : i32
    %c0_i32_0 = arith.constant 0 : i32
    %c0_i32_1 = arith.constant 0 : i32
    return %c0_i32, %c0_i32_0 : i32, i32
  }
  func.func @transform_9(%arg0: i32, %arg1: i32) -> (i32, i32, i32, i32) {
    %c0_i32 = arith.constant 0 : i32
    %c0_i32_0 = arith.constant 0 : i32
    %c0_i32_1 = arith.constant 0 : i32
    return %arg0, %arg1, %c0_i32, %c0_i32_0 : i32, i32, i32, i32
  }
}

</mosaic_0001>

<llo_original>
// kernel: db_head_forward.1
$region0: #{db_head_forward.1}
  #allocation0 [shape = 'u32[]', space=smem, size = 0x4, offset = 0x4, fixed_abs, tag = 'smem constant byte address 0x4 - core index']
  #allocation1 [shape = 'u32[144,128]{1,0:T(1,128)}', space=vmem, size = 0x12000, scoped, tag = 'internal scratch']
  #allocation2 [shape = 'f32[10,16,16]{2,1,0:T(8,128)}', space=vmem, size = 0x14000, scoped, tag = 'scratch operand']
  %s0 = inlined_call_operand.hbm [shape: f32[2,16,16,16], index: 0, kind: input, shape index: {}, may-alias: {0,1,2}]
  %s1 = inlined_call_operand.hbm [shape: f32[2,16,16,16], index: 1, kind: input, shape index: {}, may-alias: {0,1,2}]
  %s2 = inlined_call_operand.hbm [shape: f32[2,16,16,16], index: 2, kind: input, shape index: {}, may-alias: {0,1,2}]
  %s3 = inlined_call_operand.hbm [shape: f32[3,16,12], index: 3, kind: input, shape index: {}]
  %s4 = inlined_call_operand.hbm [shape: f32[1,4], index: 4, kind: input, shape index: {}]
  %s5 = inlined_call_operand.hbm [shape: f32[4,16], index: 5, kind: input, shape index: {}]
  %s6 = inlined_call_operand.hbm [shape: f32[1,16], index: 6, kind: input, shape index: {}]
  %s7 = inlined_call_operand.hbm [shape: f32[16,16], index: 7, kind: input, shape index: {}]
  %s8 = inlined_call_operand.hbm [shape: f32[1,16], index: 8, kind: input, shape index: {}]
  %s9 = inlined_call_operand.vmem [shape: f32[2,16,16,16], index: 9, kind: output, shape index: {}]
  %s10 = sld [smem:[#allocation0]]
  $region105: #{db_head_forward.1} parent=0
    _
  %s12 = ssub.s32 1, %s10
  %s13 = scalar_select 0, %s12, %s10
  $region1: #{db_head_forward.1} parent=0
    #allocation3 [shape = 'u8[131072]{0}', space=vmem, size = 0x20000, scoped, tag = 'input window, operand 0']
    #allocation4 [shape = 's32[2]{0}', space=sflag, size = 0x8, scoped, tag = 'scoped memory for db_head_forward.1']
    #allocation5 [shape = 'u8[16384]{0}', space=vmem, size = 0x4000, scoped, tag = 'input window, operand 1']
    #allocation6 [shape = 's32[2]{0}', space=sflag, size = 0x8, scoped, tag = 'scoped memory for db_head_forward.1']
    #allocation7 [shape = 'u8[16384]{0}', space=vmem, size = 0x4000, scoped, tag = 'input window, operand 2']
    #allocation8 [shape = 'u8[24576]{0}', space=vmem, size = 0x6000, scoped, tag = 'input window, operand 3, single buffered']
    #allocation9 [shape = 's32[1]{0}', space=sflag, size = 0x4, scoped, tag = 'scoped memory for db_head_forward.1']
    #allocation10 [shape = 'u8[512]{0}', space=vmem, size = 0x400, scoped, tag = 'input window, operand 4, single buffered']
    #allocation11 [shape = 'u8[2048]{0}', space=vmem, size = 0x800, scoped, tag = 'input window, operand 5, single buffered']
    #allocation12 [shape = 's32[1]{0}', space=sflag, size = 0x4, scoped, tag = 'scoped memory for db_head_forward.1']
    #allocation13 [shape = 'u8[512]{0}', space=vmem, size = 0x400, scoped, tag = 'input window, operand 6, single buffered']
    #allocation14 [shape = 'u8[8192]{0}', space=vmem, size = 0x2000, scoped, tag = 'input window, operand 7, single buffered']
    #allocation15 [shape = 's32[1]{0}', space=sflag, size = 0x4, scoped, tag = 'scoped memory for db_head_forward.1']
    #allocation16 [shape = 'u8[512]{0}', space=vmem, size = 0x400, scoped, tag = 'input window, operand 8, single buffered']
    %14 = vsyncpa [#allocation4], 0
    %s15 = scalar_lea.sflag [#allocation4], 1
    %16 = vsyncpa %s15, 0
    %17 = vsyncpa [#allocation6], 0
    %s18 = scalar_lea.sflag [#allocation6], 1
    %19 = vsyncpa %s18, 0
    %20 = vsyncpa [#allocation9], 0
    %21 = vsyncpa [#allocation12], 0
    %22 = vsyncpa [#allocation15], 0
    loop: start=0, step=1, limit=6
    $region2: #{db_head_forward.1} parent=1 // loop_pre_header
      _
    $region3: #{db_head_forward.1} parent=1 // loop_header
      %s24 = sphi 0, %s28
      %p25 = scmp.ge.s32.totalorder %s24, 6
      %s31 = sphi 0, %s43
      %s32 = sphi 0, %s39
      %s33 = sphi 0, %s31
      %s34 = sphi 0, %s32
      %s35 = sphi 0, %s33
      %s36 = sphi 0, %s34
      %s48 = sphi 0, %s50
      %s51 = sphi 0, %s48
      %s52 = sphi 0, %s51
      %s68 = sphi 0, %s52
      %s84 = sphi 0, %s86
      %s87 = sphi 0, %s84
      %s88 = sphi 0, %s87
      %s104 = sphi 0, %s88
      %s120 = sphi 0, %s122
      %s123 = sphi 0, %s120
      %s124 = sphi 0, %s123
      %s140 = sphi 0, %s124
      %s144 = sphi 0, %s144
      %s146 = sphi 0, %s144
      %s147 = sphi 0, %s146
      %s161 = sphi 0, %s147
      %s165 = sphi 0, %s165
      %s167 = sphi 0, %s165
      %s168 = sphi 0, %s167
      %s182 = sphi 0, %s168
      %s186 = sphi 0, %s186
      %s188 = sphi 0, %s186
      %s189 = sphi 0, %s188
      %s203 = sphi 0, %s189
      %s207 = sphi 0, %s207
      %s209 = sphi 0, %s207
      %s210 = sphi 0, %s209
      %s224 = sphi 0, %s210
      %s228 = sphi 0, %s228
      %s230 = sphi 0, %s228
      %s231 = sphi 0, %s230
      %s245 = sphi 0, %s231
      %s249 = sphi 0, %s249
      %s251 = sphi 0, %s249
      %s252 = sphi 0, %s251
      %s266 = sphi 0, %s252
      %s274 = sphi 0, %s276
      %s277 = sphi 0, %s274
      %s278 = sphi 0, %s277
      %s294 = sphi 0, %s278
    $region4: #{db_head_forward.1} parent=1 // loop_header_branch
      %27 = sbr.rel (%p25) target = $region8
    $region5: #{db_head_forward.1} parent=1 // loop_body
      %s29 = ssub.s32 %s24, 1
      %s30 = ssub.s32 %s24, 2
      %s37 = sadd.s32 1, %s32
      %p38 = scmp.ge.s32.totalorder %s37, 2
      %s39 = scalar_select %p38, 0, %s37
      %s40 = sadd.s32 1, %s31
      %s41 = scalar_select %p38, %s40, %s31
      %p42 = scmp.ge.s32.totalorder %s41, 2
      %s43 = scalar_select %p42, 0, %s41
      %s44 = ssub.s32 %s31, %s43
      %s45 = ssub.s32 %s32, %s39
      %s46 = sor.u32 %s44, %s45
      %p47 = scmp.eq.s32.totalorder %s46, 0
      %s49 = sadd.s32 %s48, 1
      %s50 = scalar_select %p47, %s48, %s49
      %p53 = pneg %p47
      %p54 = scmp.eq.s32.totalorder %s24, 3
      %p55 = por %p53, %p54
      %p56 = scmp.ne.s32.totalorder %s48, %s51
      %p57 = scmp.eq.s32.totalorder %s24, 0
      %p58 = por %p56, %p57
      %p59 = scmp.ne.s32.totalorder %s48, %s51
      %p60 = scmp.eq.s32.totalorder %s29, 3
      %p61 = por %p59, %p60
      %p62 = scmp.ne.s32.totalorder %s51, %s52
      %p63 = scmp.eq.s32.totalorder %s29, 0
      %p64 = por %p62, %p63
      %p65 = scmp.ne.s32.totalorder %s51, %s52
      %p66 = scmp.eq.s32.totalorder %s30, 3
      %p67 = por %p65, %p66
      %p69 = scmp.ne.s32.totalorder %s52, %s68
      %p70 = scmp.eq.s32.totalorder %s30, 0
      %p71 = por %p69, %p70
      %s72 = smul.u32 %s32, 8
      %s73 = ssub.s32 %s72, 1
      %p74 = scmp.gt.s32.totalorder %s73, 0
      %s75 = scalar_select %p74, %s73, 0
      %s76 = smul.u32 %s39, 8
      %s77 = ssub.s32 %s76, 1
      %p78 = scmp.gt.s32.totalorder %s77, 0
      %s79 = scalar_select %p78, %s77, 0
      %s80 = ssub.s32 %s31, %s43
      %s81 = ssub.s32 %s75, %s79
      %s82 = sor.u32 %s80, %s81
      %p83 = scmp.eq.s32.totalorder %s82, 0
      %s85 = sadd.s32 %s84, 1
      %s86 = scalar_select %p83, %s84, %s85
      %p89 = pneg %p83
      %p90 = scmp.eq.s32.totalorder %s24, 3
      %p91 = por %p89, %p90
      %p92 = scmp.ne.s32.totalorder %s84, %s87
      %p93 = scmp.eq.s32.totalorder %s24, 0
      %p94 = por %p92, %p93
      %p95 = scmp.ne.s32.totalorder %s84, %s87
      %p96 = scmp.eq.s32.totalorder %s29, 3
      %p97 = por %p95, %p96
      %p98 = scmp.ne.s32.totalorder %s87, %s88
      %p99 = scmp.eq.s32.totalorder %s29, 0
      %p100 = por %p98, %p99
      %p101 = scmp.ne.s32.totalorder %s87, %s88
      %p102 = scmp.eq.s32.totalorder %s30, 3
      %p103 = por %p101, %p102
      %p105 = scmp.ne.s32.totalorder %s88, %s104
      %p106 = scmp.eq.s32.totalorder %s30, 0
      %p107 = por %p105, %p106
      %s108 = sadd.s32 %s32, 1
      %s109 = smul.u32 %s108, 8
      %p110 = scmp.lt.s32.totalorder %s109, 15
      %s111 = scalar_select %p110, %s109, 15
      %s112 = sadd.s32 %s39, 1
      %s113 = smul.u32 %s112, 8
      %p114 = scmp.lt.s32.totalorder %s113, 15
      %s115 = scalar_select %p114, %s113, 15
      %s116 = ssub.s32 %s31, %s43
      %s117 = ssub.s32 %s111, %s115
      %s118 = sor.u32 %s116, %s117
      %p119 = scmp.eq.s32.totalorder %s118, 0
      %s121 = sadd.s32 %s120, 1
      %s122 = scalar_select %p119, %s120, %s121
      %p125 = pneg %p119
      %p126 = scmp.eq.s32.totalorder %s24, 3
      %p127 = por %p125, %p126
      %p128 = scmp.ne.s32.totalorder %s120, %s123
      %p129 = scmp.eq.s32.totalorder %s24, 0
      %p130 = por %p128, %p129
      %p131 = scmp.ne.s32.totalorder %s120, %s123
      %p132 = scmp.eq.s32.totalorder %s29, 3
      %p133 = por %p131, %p132
      %p134 = scmp.ne.s32.totalorder %s123, %s124
      %p135 = scmp.eq.s32.totalorder %s29, 0
      %p136 = por %p134, %p135
      %p137 = scmp.ne.s32.totalorder %s123, %s124
      %p138 = scmp.eq.s32.totalorder %s30, 3
      %p139 = por %p137, %p138
      %p141 = scmp.ne.s32.totalorder %s124, %s140
      %p142 = scmp.eq.s32.totalorder %s30, 0
      %p143 = por %p141, %p142
      %s145 = sadd.s32 %s144, 1
      %p148 = scmp.eq.s32.totalorder %s24, 3
      %p149 = scmp.ne.s32.totalorder %s144, %s146
      %p150 = scmp.eq.s32.totalorder %s24, 0
      %p151 = por %p149, %p150
      %p152 = scmp.ne.s32.totalorder %s144, %s146
      %p153 = scmp.eq.s32.totalorder %s29, 3
      %p154 = por %p152, %p153
      %p155 = scmp.ne.s32.totalorder %s146, %s147
      %p156 = scmp.eq.s32.totalorder %s29, 0
      %p157 = por %p155, %p156
      %p158 = scmp.ne.s32.totalorder %s146, %s147
      %p159 = scmp.eq.s32.totalorder %s30, 3
      %p160 = por %p158, %p159
      %p162 = scmp.ne.s32.totalorder %s147, %s161
      %p163 = scmp.eq.s32.totalorder %s30, 0
      %p164 = por %p162, %p163
      %s166 = sadd.s32 %s165, 1
      %p169 = scmp.eq.s32.totalorder %s24, 3
      %p170 = scmp.ne.s32.totalorder %s165, %s167
      %p171 = scmp.eq.s32.totalorder %s24, 0
      %p172 = por %p170, %p171
      %p173 = scmp.ne.s32.totalorder %s165, %s167
      %p174 = scmp.eq.s32.totalorder %s29, 3
      %p175 = por %p173, %p174
      %p176 = scmp.ne.s32.totalorder %s167, %s168
      %p177 = scmp.eq.s32.totalorder %s29, 0
      %p178 = por %p176, %p177
      %p179 = scmp.ne.s32.totalorder %s167, %s168
      %p180 = scmp.eq.s32.totalorder %s30, 3
      %p181 = por %p179, %p180
      %p183 = scmp.ne.s32.totalorder %s168, %s182
      %p184 = scmp.eq.s32.totalorder %s30, 0
      %p185 = por %p183, %p184
      %s187 = sadd.s32 %s186, 1
      %p190 = scmp.eq.s32.totalorder %s24, 3
      %p191 = scmp.ne.s32.totalorder %s186, %s188
      %p192 = scmp.eq.s32.totalorder %s24, 0
      %p193 = por %p191, %p192
      %p194 = scmp.ne.s32.totalorder %s186, %s188
      %p195 = scmp.eq.s32.totalorder %s29, 3
      %p196 = por %p194, %p195
      %p197 = scmp.ne.s32.totalorder %s188, %s189
      %p198 = scmp.eq.s32.totalorder %s29, 0
      %p199 = por %p197, %p198
      %p200 = scmp.ne.s32.totalorder %s188, %s189
      %p201 = scmp.eq.s32.totalorder %s30, 3
      %p202 = por %p200, %p201
      %p204 = scmp.ne.s32.totalorder %s189, %s203
      %p205 = scmp.eq.s32.totalorder %s30, 0
      %p206 = por %p204, %p205
      %s208 = sadd.s32 %s207, 1
      %p211 = scmp.eq.s32.totalorder %s24, 3
      %p212 = scmp.ne.s32.totalorder %s207, %s209
      %p213 = scmp.eq.s32.totalorder %s24, 0
      %p214 = por %p212, %p213
      %p215 = scmp.ne.s32.totalorder %s207, %s209
      %p216 = scmp.eq.s32.totalorder %s29, 3
      %p217 = por %p215, %p216
      %p218 = scmp.ne.s32.totalorder %s209, %s210
      %p219 = scmp.eq.s32.totalorder %s29, 0
      %p220 = por %p218, %p219
      %p221 = scmp.ne.s32.totalorder %s209, %s210
      %p222 = scmp.eq.s32.totalorder %s30, 3
      %p223 = por %p221, %p222
      %p225 = scmp.ne.s32.totalorder %s210, %s224
      %p226 = scmp.eq.s32.totalorder %s30, 0
      %p227 = por %p225, %p226
      %s229 = sadd.s32 %s228, 1
      %p232 = scmp.eq.s32.totalorder %s24, 3
      %p233 = scmp.ne.s32.totalorder %s228, %s230
      %p234 = scmp.eq.s32.totalorder %s24, 0
      %p235 = por %p233, %p234
      %p236 = scmp.ne.s32.totalorder %s228, %s230
      %p237 = scmp.eq.s32.totalorder %s29, 3
      %p238 = por %p236, %p237
      %p239 = scmp.ne.s32.totalorder %s230, %s231
      %p240 = scmp.eq.s32.totalorder %s29, 0
      %p241 = por %p239, %p240
      %p242 = scmp.ne.s32.totalorder %s230, %s231
      %p243 = scmp.eq.s32.totalorder %s30, 3
      %p244 = por %p242, %p243
      %p246 = scmp.ne.s32.totalorder %s231, %s245
      %p247 = scmp.eq.s32.totalorder %s30, 0
      %p248 = por %p246, %p247
      %s250 = sadd.s32 %s249, 1
      %p253 = scmp.eq.s32.totalorder %s24, 3
      %p254 = scmp.ne.s32.totalorder %s249, %s251
      %p255 = scmp.eq.s32.totalorder %s24, 0
      %p256 = por %p254, %p255
      %p257 = scmp.ne.s32.totalorder %s249, %s251
      %p258 = scmp.eq.s32.totalorder %s29, 3
      %p259 = por %p257, %p258
      %p260 = scmp.ne.s32.totalorder %s251, %s252
      %p261 = scmp.eq.s32.totalorder %s29, 0
      %p262 = por %p260, %p261
      %p263 = scmp.ne.s32.totalorder %s251, %s252
      %p264 = scmp.eq.s32.totalorder %s30, 3
      %p265 = por %p263, %p264
      %p267 = scmp.ne.s32.totalorder %s252, %s266
      %p268 = scmp.eq.s32.totalorder %s30, 0
      %p269 = por %p267, %p268
      %s270 = ssub.s32 %s31, %s43
      %s271 = ssub.s32 %s32, %s39
      %s272 = sor.u32 %s270, %s271
      %p273 = scmp.eq.s32.totalorder %s272, 0
      %s275 = sadd.s32 %s274, 1
      %s276 = scalar_select %p273, %s274, %s275
      %p279 = pneg %p273
      %p280 = scmp.eq.s32.totalorder %s24, 3
      %p281 = por %p279, %p280
      %p282 = scmp.ne.s32.totalorder %s274, %s277
      %p283 = scmp.eq.s32.totalorder %s24, 0
      %p284 = por %p282, %p283
      %p285 = scmp.ne.s32.totalorder %s274, %s277
      %p286 = scmp.eq.s32.totalorder %s29, 3
      %p287 = por %p285, %p286
      %p288 = scmp.ne.s32.totalorder %s277, %s278
      %p289 = scmp.eq.s32.totalorder %s29, 0
      %p290 = por %p288, %p289
      %p291 = scmp.ne.s32.totalorder %s277, %s278
      %p292 = scmp.eq.s32.totalorder %s30, 3
      %p293 = por %p291, %p292
      %p295 = scmp.ne.s32.totalorder %s278, %s294
      %p296 = scmp.eq.s32.totalorder %s30, 0
      %p297 = por %p295, %p296
      %p298 = scmp.le.s32.totalorder 1, %s24
      %p299 = scmp.lt.s32.totalorder %s24, 5
      %p300 = pnand %p298, %p299
      %p301 = pneg %p300
      // Predicated region
      $region9: #{db_head_forward.1} parent=5 // pred_check
        _
      $region10: #{db_head_forward.1} parent=5 // pred_check_branch
        %303 = sbr.rel (%p300) target = $region12
      $region11: #{db_head_forward.1} parent=5 // pred_region
        %s304 = ssub.s32 %s24, 1
        // Predicated region
        $region13: #{db_head_forward.1} parent=11 // pred_check
          %p305 = pneg %p157
        $region14: #{db_head_forward.1} parent=11 // pred_check_branch
          %307 = sbr.rel (%p305) target = $region16
        $region15: #{db_head_forward.1} parent=11 // pred_region
          %s309 = ssub.s32 768, 768
          %310 = vsyncadd [#allocation9], %s309
          %s311 = sshll.u32 [#allocation8], 4
          %s312 = int_to_ptr.vmem [resolvable:$true] %s311
          %317 = dma.hbm_to_vmem [thread:$0]  %s3, 768, %s312, [#allocation9], 128, 128, 8
        $region16: #{db_head_forward.1} parent=11 // pred_fallthru
          _
        // Predicated region
        $region17: #{db_head_forward.1} parent=11 // pred_check
          %p318 = pneg %p178
        $region18: #{db_head_forward.1} parent=11 // pred_check_branch
          %320 = sbr.rel (%p318) target = $region20
        $region19: #{db_head_forward.1} parent=11 // pred_region
          %s322 = ssub.s32 16, 16
          %323 = vsyncadd [#allocation9], %s322
          %s325 = sshll.u32 [#allocation10], 4
          %s326 = int_to_ptr.vmem [resolvable:$true] %s325
          %328 = dma.hbm_to_vmem [thread:$0]  %s4, 16, %s326, [#allocation9]
        $region20: #{db_head_forward.1} parent=11 // pred_fallthru
          _
        // Predicated region
        $region21: #{db_head_forward.1} parent=11 // pred_check
          %p329 = pneg %p199
        $region22: #{db_head_forward.1} parent=11 // pred_check_branch
          %331 = sbr.rel (%p329) target = $region24
        $region23: #{db_head_forward.1} parent=11 // pred_region
          %s333 = ssub.s32 64, 64
          %334 = vsyncadd [#allocation12], %s333
          %s336 = sshll.u32 [#allocation11], 4
          %s337 = int_to_ptr.vmem [resolvable:$true] %s336
          %339 = dma.hbm_to_vmem [thread:$0]  %s5, 64, %s337, [#allocation12]
        $region24: #{db_head_forward.1} parent=11 // pred_fallthru
          _
        // Predicated region
        $region25: #{db_head_forward.1} parent=11 // pred_check
          %p340 = pneg %p220
        $region26: #{db_head_forward.1} parent=11 // pred_check_branch
          %342 = sbr.rel (%p340) target = $region28
        $region27: #{db_head_forward.1} parent=11 // pred_region
          %s344 = ssub.s32 16, 16
          %345 = vsyncadd [#allocation12], %s344
          %s347 = sshll.u32 [#allocation13], 4
          %s348 = int_to_ptr.vmem [resolvable:$true] %s347
          %350 = dma.hbm_to_vmem [thread:$0]  %s6, 16, %s348, [#allocation12]
        $region28: #{db_head_forward.1} parent=11 // pred_fallthru
          _
        // Predicated region
        $region29: #{db_head_forward.1} parent=11 // pred_check
          %p351 = pneg %p241
        $region30: #{db_head_forward.1} parent=11 // pred_check_branch
          %353 = sbr.rel (%p351) target = $region32
        $region31: #{db_head_forward.1} parent=11 // pred_region
          %s355 = ssub.s32 256, 256
          %356 = vsyncadd [#allocation15], %s355
          %s357 = sshll.u32 [#allocation14], 4
          %s358 = int_to_ptr.vmem [resolvable:$true] %s357
          %363 = dma.hbm_to_vmem [thread:$0]  %s7, 256, %s358, [#allocation15], 128, 128, 8
        $region32: #{db_head_forward.1} parent=11 // pred_fallthru
          _
        // Predicated region
        $region33: #{db_head_forward.1} parent=11 // pred_check
          %p364 = pneg %p262
        $region34: #{db_head_forward.1} parent=11 // pred_check_branch
          %366 = sbr.rel (%p364) target = $region36
        $region35: #{db_head_forward.1} parent=11 // pred_region
          %s368 = ssub.s32 16, 16
          %369 = vsyncadd [#allocation15], %s368
          %s371 = sshll.u32 [#allocation16], 4
          %s372 = int_to_ptr.vmem [resolvable:$true] %s371
          %374 = dma.hbm_to_vmem [thread:$0]  %s8, 16, %s372, [#allocation15]
        $region36: #{db_head_forward.1} parent=11 // pred_fallthru
          _
      $region12: #{db_head_forward.1} parent=5 // pred_fallthru
        _
      %p375 = scmp.lt.s32.totalorder %s24, 4
      // Predicated region
      $region37: #{db_head_forward.1} parent=5 // pred_check
        %p376 = pneg %p375
      $region38: #{db_head_forward.1} parent=5 // pred_check_branch
        %378 = sbr.rel (%p376) target = $region40
      $region39: #{db_head_forward.1} parent=5 // pred_region
        // Predicated region
        $region41: #{db_head_forward.1} parent=39 // pred_check
          %p379 = pneg %p58
        $region42: #{db_head_forward.1} parent=39 // pred_check_branch
          %381 = sbr.rel (%p379) target = $region44
        $region43: #{db_head_forward.1} parent=39 // pred_region
          %s382 = sand.u32 %s48, 1
          %s383 = scalar_lea.sflag [#allocation4], %s382
          %s384 = sand.u32 %s48, 1
          %s385 = smul.addr %s384, 128
          %s386 = scalar_lea.vmem [#allocation3], %s385
          %s387 = smul.u32 8, %s32
          %s389 = ssub.s32 2048, 2048
          %390 = vsyncadd %s383, %s389
          %s391 = smul.addr %s387, 2
          %s392 = smul.addr %s31, 32
          %s393 = sadd.s32 %s391, %s392
          %s394 = smul.addr %s393, 128
          %s395 = scalar_lea.hbm %s0, %s394
          %s396 = sshll.u32 %s386, 4
          %s397 = int_to_ptr.vmem [resolvable:$true] %s396
          %402 = dma.hbm_to_vmem [thread:$0]  %s395, 2048, %s397, %s383, 128, 128, 8
        $region44: #{db_head_forward.1} parent=39 // pred_fallthru
          _
        // Predicated region
        $region45: #{db_head_forward.1} parent=39 // pred_check
          %p403 = pneg %p94
        $region46: #{db_head_forward.1} parent=39 // pred_check_branch
          %405 = sbr.rel (%p403) target = $region48
        $region47: #{db_head_forward.1} parent=39 // pred_region
          %s406 = sand.u32 %s24, 1
          %s407 = scalar_lea.sflag [#allocation6], %s406
          %s408 = sand.u32 %s84, 1
          %s409 = smul.addr %s408, 16
          %s410 = scalar_lea.vmem [#allocation5], %s409
          %s411 = smul.u32 %s32, 8
          %s412 = ssub.s32 %s411, 1
          %p413 = scmp.gt.s32.totalorder %s412, 0
          %s414 = scalar_select %p413, %s412, 0
          %s416 = ssub.s32 256, 256
          %417 = vsyncadd %s407, %s416
          %s418 = smul.addr %s414, 2
          %s419 = smul.addr %s31, 32
          %s420 = sadd.s32 %s418, %s419
          %s421 = smul.addr %s420, 128
          %s422 = scalar_lea.hbm %s1, %s421
          %s423 = sshll.u32 %s410, 4
          %s424 = int_to_ptr.vmem [resolvable:$true] %s423
          %429 = dma.hbm_to_vmem [thread:$0]  %s422, 256, %s424, %s407, 128, 128, 8
        $region48: #{db_head_forward.1} parent=39 // pred_fallthru
          _
        // Predicated region
        $region49: #{db_head_forward.1} parent=39 // pred_check
          %p430 = pneg %p130
        $region50: #{db_head_forward.1} parent=39 // pred_check_branch
          %432 = sbr.rel (%p430) target = $region52
        $region51: #{db_head_forward.1} parent=39 // pred_region
          %s433 = sand.u32 %s24, 1
          %s434 = scalar_lea.sflag [#allocation6], %s433
          %s435 = sand.u32 %s120, 1
          %s436 = smul.addr %s435, 16
          %s437 = scalar_lea.vmem [#allocation7], %s436
          %s438 = sadd.s32 %s32, 1
          %s439 = smul.u32 %s438, 8
          %p440 = scmp.lt.s32.totalorder %s439, 15
          %s441 = scalar_select %p440, %s439, 15
          %s443 = ssub.s32 256, 256
          %444 = vsyncadd %s434, %s443
          %s445 = smul.addr %s441, 2
          %s446 = smul.addr %s31, 32
          %s447 = sadd.s32 %s445, %s446
          %s448 = smul.addr %s447, 128
          %s449 = scalar_lea.hbm %s2, %s448
          %s450 = sshll.u32 %s437, 4
          %s451 = int_to_ptr.vmem [resolvable:$true] %s450
          %456 = dma.hbm_to_vmem [thread:$0]  %s449, 256, %s451, %s434, 128, 128, 8
        $region52: #{db_head_forward.1} parent=39 // pred_fallthru
          _
      $region40: #{db_head_forward.1} parent=5 // pred_fallthru
        _
      %p457 = scmp.le.s32.totalorder 1, %s24
      %p458 = scmp.lt.s32.totalorder %s24, 5
      %p459 = pnand %p457, %p458
      %p460 = pneg %p459
      // Predicated region
      $region53: #{db_head_forward.1} parent=5 // pred_check
        _
      $region54: #{db_head_forward.1} parent=5 // pred_check_branch
        %462 = sbr.rel (%p459) target = $region56
      $region55: #{db_head_forward.1} parent=5 // pred_region
        %s463 = ssub.s32 %s24, 1
        %s464 = sand.u32 %s51, 1
        %s465 = scalar_lea.sflag [#allocation4], %s464
        %s466 = sand.u32 %s51, 1
        %s467 = smul.addr %s466, 128
        %s468 = scalar_lea.vmem [#allocation3], %s467
        // Predicated region
        $region57: #{db_head_forward.1} parent=55 // pred_check
          %p469 = pneg %p64
        $region58: #{db_head_forward.1} parent=55 // pred_check_branch
          %471 = sbr.rel (%p469) target = $region60
        $region59: #{db_head_forward.1} parent=55 // pred_region
          %472 = dma.done %s465, 2048
        $region60: #{db_head_forward.1} parent=55 // pred_fallthru
          _
        %s473 = sand.u32 %s29, 1
        %s474 = scalar_lea.sflag [#allocation6], %s473
        %s475 = sand.u32 %s87, 1
        %s476 = smul.addr %s475, 16
        %s477 = scalar_lea.vmem [#allocation5], %s476
        // Predicated region
        $region61: #{db_head_forward.1} parent=55 // pred_check
          %p478 = pneg %p100
        $region62: #{db_head_forward.1} parent=55 // pred_check_branch
          %480 = sbr.rel (%p478) target = $region64
        $region63: #{db_head_forward.1} parent=55 // pred_region
          %481 = dma.done %s474, 256
        $region64: #{db_head_forward.1} parent=55 // pred_fallthru
          _
        %s482 = sand.u32 %s29, 1
        %s483 = scalar_lea.sflag [#allocation6], %s482
        %s484 = sand.u32 %s123, 1
        %s485 = smul.addr %s484, 16
        %s486 = scalar_lea.vmem [#allocation7], %s485
        // Predicated region
        $region65: #{db_head_forward.1} parent=55 // pred_check
          %p487 = pneg %p136
        $region66: #{db_head_forward.1} parent=55 // pred_check_branch
          %489 = sbr.rel (%p487) target = $region68
        $region67: #{db_head_forward.1} parent=55 // pred_region
          %490 = dma.done %s483, 256
        $region68: #{db_head_forward.1} parent=55 // pred_fallthru
          _
        // Predicated region
        $region69: #{db_head_forward.1} parent=55 // pred_check
          %p491 = pneg %p157
        $region70: #{db_head_forward.1} parent=55 // pred_check_branch
          %493 = sbr.rel (%p491) target = $region72
        $region71: #{db_head_forward.1} parent=55 // pred_region
          %494 = dma.done [#allocation9], 768
        $region72: #{db_head_forward.1} parent=55 // pred_fallthru
          _
        // Predicated region
        $region73: #{db_head_forward.1} parent=55 // pred_check
          %p495 = pneg %p178
        $region74: #{db_head_forward.1} parent=55 // pred_check_branch
          %497 = sbr.rel (%p495) target = $region76
        $region75: #{db_head_forward.1} parent=55 // pred_region
          %498 = dma.done [#allocation9], 16
        $region76: #{db_head_forward.1} parent=55 // pred_fallthru
          _
        // Predicated region
        $region77: #{db_head_forward.1} parent=55 // pred_check
          %p499 = pneg %p199
        $region78: #{db_head_forward.1} parent=55 // pred_check_branch
          %501 = sbr.rel (%p499) target = $region80
        $region79: #{db_head_forward.1} parent=55 // pred_region
          %502 = dma.done [#allocation12], 64
        $region80: #{db_head_forward.1} parent=55 // pred_fallthru
          _
        // Predicated region
        $region81: #{db_head_forward.1} parent=55 // pred_check
          %p503 = pneg %p220
        $region82: #{db_head_forward.1} parent=55 // pred_check_branch
          %505 = sbr.rel (%p503) target = $region84
        $region83: #{db_head_forward.1} parent=55 // pred_region
          %506 = dma.done [#allocation12], 16
        $region84: #{db_head_forward.1} parent=55 // pred_fallthru
          _
        // Predicated region
        $region85: #{db_head_forward.1} parent=55 // pred_check
          %p507 = pneg %p241
        $region86: #{db_head_forward.1} parent=55 // pred_check_branch
          %509 = sbr.rel (%p507) target = $region88
        $region87: #{db_head_forward.1} parent=55 // pred_region
          %510 = dma.done [#allocation15], 256
        $region88: #{db_head_forward.1} parent=55 // pred_fallthru
          _
        // Predicated region
        $region89: #{db_head_forward.1} parent=55 // pred_check
          %p511 = pneg %p262
        $region90: #{db_head_forward.1} parent=55 // pred_check_branch
          %513 = sbr.rel (%p511) target = $region92
        $region91: #{db_head_forward.1} parent=55 // pred_region
          %514 = dma.done [#allocation15], 16
        $region92: #{db_head_forward.1} parent=55 // pred_fallthru
          _
        %s515 = sand.u32 %s51, 1
        %s516 = scalar_lea.sflag [#allocation4], %s515
        %s517 = sand.u32 %s51, 1
        %s518 = smul.addr %s517, 128
        %s519 = scalar_lea.vmem [#allocation3], %s518
        %p520 = pneg %p64
        %p521 = pneg %p61
        %s522 = sand.u32 %s29, 1
        %s523 = scalar_lea.sflag [#allocation6], %s522
        %s524 = sand.u32 %s87, 1
        %s525 = smul.addr %s524, 16
        %s526 = scalar_lea.vmem [#allocation5], %s525
        %p527 = pneg %p100
        %p528 = pneg %p97
        %s529 = sand.u32 %s29, 1
        %s530 = scalar_lea.sflag [#allocation6], %s529
        %s531 = sand.u32 %s123, 1
        %s532 = smul.addr %s531, 16
        %s533 = scalar_lea.vmem [#allocation7], %s532
        %p534 = pneg %p136
        %p535 = pneg %p133
        %p536 = pneg %p157
        %p537 = pneg %p154
        %p538 = pneg %p178
        %p539 = pneg %p175
        %p540 = pneg %p199
        %p541 = pneg %p196
        %p542 = pneg %p220
        %p543 = pneg %p217
        %p544 = pneg %p241
        %p545 = pneg %p238
        %p546 = pneg %p262
        %p547 = pneg %p259
        %p548 = pneg %p290
        %p549 = pneg %p287
        %s550 = smul.u32 8, %s34
        %p551 = scmp.lt.s32.totalorder %s33, 1
        %s552 = scalar_select %p551, %s33, 1
        %p553 = scmp.lt.s32.totalorder %s550, 15
        %s554 = scalar_select %p553, %s550, 15
        %s555 = smul.addr %s554, 2
        %s556 = smul.addr %s552, 32
        %s557 = sadd.s32 %s555, %s556
        %s558 = smul.addr %s557, 8
        %s559 = scalar_lea.vmem %s9, %s558
        %s560 = smul.u32 8, %s34
        %s561 = smul.u32 %s34, 8
        %s562 = ssub.s32 %s561, 1
        %p563 = scmp.gt.s32.totalorder %s562, 0
        %s564 = scalar_select %p563, %s562, 0
        %s565 = sadd.s32 %s34, 1
        %s566 = smul.u32 %s565, 8
        %p567 = scmp.lt.s32.totalorder %s566, 15
        %s568 = scalar_select %p567, %s566, 15
        %s569 = smul.u32 8, %s34
        %p570 = scmp.lt.s32.totalorder %s33, 1
        %s571 = scalar_select %p570, %s33, 1
        %p572 = scmp.lt.s32.totalorder %s569, 15
        %s573 = scalar_select %p572, %s569, 15
        %s574 = smul.addr %s573, 2
        %s575 = smul.addr %s571, 32
        %s576 = sadd.s32 %s574, %s575
        %s577 = smul.addr %s576, 8
        %s578 = scalar_lea.vmem %s9, %s577
        %s579 = smul.u32 8, %s34
        %p580 = scmp.gt.s32.totalorder %s34, 0
        %s581 = scalar_select %p580, 1.0, 0.0
        %p582 = scmp.lt.s32.totalorder %s34, 1
        %s583 = scalar_select %p582, 1.0, 0.0
        %v584 = vld [vmem:[%s477] sm:$0xff]
        %v585 = vld [vmem:[%s477 + $0x8] sm:$0xff]
        %v586 = vstv %s581
        %v587 = vmul.f32 %v584, %v586
        %v588 = vmul.f32 %v585, %v586
        %vm589 = vcmask 130048
        %590 = vst.msk [vmem:[#allocation2] sm:$0xff] %vm589, %v587
        %591 = vst.msk [vmem:[#allocation2 + $0x8] sm:$0xff] %vm589, %v588
        %v592 = vld [vmem:[%s468] sm:$0xff]
        %v593 = vld [vmem:[%s468 + $0x8] sm:$0xff]
        %v594 = vld [vmem:[%s468 + $0x10] sm:$0xff]
        %v595 = vld [vmem:[%s468 + $0x18] sm:$0xff]
        %v596 = vld [vmem:[%s468 + $0x20] sm:$0xff]
        %v597 = vld [vmem:[%s468 + $0x28] sm:$0xff]
        %v598 = vld [vmem:[%s468 + $0x30] sm:$0xff]
        %v599 = vld [vmem:[%s468 + $0x38] sm:$0xff]
        %v600 = vld [vmem:[%s468 + $0x40] sm:$0xff]
        %v601 = vld [vmem:[%s468 + $0x48] sm:$0xff]
        %v602 = vld [vmem:[%s468 + $0x50] sm:$0xff]
        %v603 = vld [vmem:[%s468 + $0x58] sm:$0xff]
        %v604 = vld [vmem:[%s468 + $0x60] sm:$0xff]
        %v605 = vld [vmem:[%s468 + $0x68] sm:$0xff]
        %v606 = vld [vmem:[%s468 + $0x70] sm:$0xff]
        %v607 = vld [vmem:[%s468 + $0x78] sm:$0xff]
        %s608 = scalar_lea.vmem [#allocation2], 16
        %609 = vst.msk [vmem:[%s608] sm:$0xff] %vm589, %v592
        %610 = vst.msk [vmem:[%s608 + $0x8] sm:$0xff] %vm589, %v593
        %611 = vst.msk [vmem:[%s608 + $0x10] sm:$0xff] %vm589, %v594
        %612 = vst.msk [vmem:[%s608 + $0x18] sm:$0xff] %vm589, %v595
        %613 = vst.msk [vmem:[%s608 + $0x20] sm:$0xff] %vm589, %v596
        %614 = vst.msk [vmem:[%s608 + $0x28] sm:$0xff] %vm589, %v597
        %615 = vst.msk [vmem:[%s608 + $0x30] sm:$0xff] %vm589, %v598
        %616 = vst.msk [vmem:[%s608 + $0x38] sm:$0xff] %vm589, %v599
        %617 = vst.msk [vmem:[%s608 + $0x40] sm:$0xff] %vm589, %v600
        %618 = vst.msk [vmem:[%s608 + $0x48] sm:$0xff] %vm589, %v601
        %619 = vst.msk [vmem:[%s608 + $0x50] sm:$0xff] %vm589, %v602
        %620 = vst.msk [vmem:[%s608 + $0x58] sm:$0xff] %vm589, %v603
        %621 = vst.msk [vmem:[%s608 + $0x60] sm:$0xff] %vm589, %v604
        %622 = vst.msk [vmem:[%s608 + $0x68] sm:$0xff] %vm589, %v605
        %623 = vst.msk [vmem:[%s608 + $0x70] sm:$0xff] %vm589, %v606
        %624 = vst.msk [vmem:[%s608 + $0x78] sm:$0xff] %vm589, %v607
        %v625 = vld [vmem:[%s486] sm:$0xff]
        %v626 = vld [vmem:[%s486 + $0x8] sm:$0xff]
        %v627 = vstv %s583
        %v628 = vmul.f32 %v625, %v627
        %v629 = vmul.f32 %v626, %v627
        %s630 = scalar_lea.vmem [#allocation2], 144
        %631 = vst.msk [vmem:[%s630] sm:$0xff] %vm589, %v628
        %632 = vst.msk [vmem:[%s630 + $0x8] sm:$0xff] %vm589, %v629
        %v633 = vld [vmem:[#allocation2] sm:$0xff]
        %v634 = vld [vmem:[#allocation2 + $0x8] sm:$0xff]
        %v635 = vld [vmem:[#allocation2 + $0x10] sm:$0xff]
        %v636 = vld [vmem:[#allocation2 + $0x18] sm:$0xff]
        %v637 = vld [vmem:[#allocation2 + $0x20] sm:$0xff]
        %v638 = vld [vmem:[#allocation2 + $0x28] sm:$0xff]
        %v639 = vld [vmem:[#allocation2 + $0x30] sm:$0xff]
        %v640 = vld [vmem:[#allocation2 + $0x38] sm:$0xff]
        %v641 = vld [vmem:[#allocation2 + $0x40] sm:$0xff]
        %v642 = vld [vmem:[#allocation2 + $0x48] sm:$0xff]
        %v643 = vld [vmem:[#allocation2 + $0x50] sm:$0xff]
        %v644 = vld [vmem:[#allocation2 + $0x58] sm:$0xff]
        %v645 = vld [vmem:[#allocation2 + $0x60] sm:$0xff]
        %v646 = vld [vmem:[#allocation2 + $0x68] sm:$0xff]
        %v647 = vld [vmem:[#allocation2 + $0x70] sm:$0xff]
        %v648 = vld [vmem:[#allocation2 + $0x78] sm:$0xff]
        %v649 = vld [vmem:[#allocation8] sm:$0xff]
        %v650 = vld [vmem:[#allocation8 + $0x8] sm:$0xff]
        %v651 = vld [vmem:[%s608] sm:$0xff]
        %v652 = vld [vmem:[%s608 + $0x8] sm:$0xff]
        %v653 = vld [vmem:[%s608 + $0x10] sm:$0xff]
        %v654 = vld [vmem:[%s608 + $0x18] sm:$0xff]
        %v655 = vld [vmem:[%s608 + $0x20] sm:$0xff]
        %v656 = vld [vmem:[%s608 + $0x28] sm:$0xff]
        %v657 = vld [vmem:[%s608 + $0x30] sm:$0xff]
        %v658 = vld [vmem:[%s608 + $0x38] sm:$0xff]
        %v659 = vld [vmem:[%s608 + $0x40] sm:$0xff]
        %v660 = vld [vmem:[%s608 + $0x48] sm:$0xff]
        %v661 = vld [vmem:[%s608 + $0x50] sm:$0xff]
        %v662 = vld [vmem:[%s608 + $0x58] sm:$0xff]
        %v663 = vld [vmem:[%s608 + $0x60] sm:$0xff]
        %v664 = vld [vmem:[%s608 + $0x68] sm:$0xff]
        %v665 = vld [vmem:[%s608 + $0x70] sm:$0xff]
        %v666 = vld [vmem:[%s608 + $0x78] sm:$0xff]
        %s667 = scalar_lea.vmem [#allocation8], 16
        %v668 = vld [vmem:[%s667] sm:$0xff]
        %v669 = vld [vmem:[%s667 + $0x8] sm:$0xff]
        %v671 = vsel %vm589, %v651, 0
        %v674 = vsel %vm589, %v652, 0
        %v677 = vsel %vm589, %v653, 0
        %v680 = vsel %vm589, %v654, 0
        %v683 = vsel %vm589, %v655, 0
        %v686 = vsel %vm589, %v656, 0
        %v689 = vsel %vm589, %v657, 0
        %v692 = vsel %vm589, %v658, 0
        %v695 = vsel %vm589, %v659, 0
        %v698 = vsel %vm589, %v660, 0
        %v701 = vsel %vm589, %v661, 0
        %v704 = vsel %vm589, %v662, 0
        %v707 = vsel %vm589, %v663, 0
        %v710 = vsel %vm589, %v664, 0
        %v713 = vsel %vm589, %v665, 0
        %v716 = vsel %vm589, %v666, 0
        %718 = vmatprep.subr.mxu0 0.0
        %719 = vmatpush1.msra.mxu0 0.0
        %720 = vmatprep.subr.mxu0 0.0
        %721 = vmatpush1.msra.mxu0 0.0
        %722 = vmatprep.subr.mxu0 0.0
        %723 = vmatpush1.msra.mxu0 0.0
        %724 = vmatprep.subr.mxu0 0.0
        %725 = vmatpush1.msra.mxu0 0.0
        %726 = vmatprep.subr.mxu0 0.0
        %727 = vmatpush1.msra.mxu0 0.0
        %728 = vmatprep.subr.mxu0 0.0
        %729 = vmatpush1.msra.mxu0 0.0
        %730 = vmatprep.subr.mxu0 0.0
        %731 = vmatpush1.msra.mxu0 0.0
        %732 = vmatprep.subr.mxu0 0.0
        %733 = vmatpush1.msra.mxu0 0.0
        %734 = vmatprep.subr.mxu0 0.0
        %735 = vmatpush1.msra.mxu0 0.0
        %736 = vmatprep.subr.mxu0 0.0
        %737 = vmatpush1.msra.mxu0 0.0
        %738 = vmatprep.subr.mxu0 0.0
        %739 = vmatpush1.msra.mxu0 0.0
        %740 = vmatprep.subr.mxu0 0.0
        %741 = vmatpush1.msra.mxu0 0.0
        %742 = vmatprep.subr.mxu0 0.0
        %743 = vmatpush1.msra.mxu0 0.0
        %744 = vmatprep.subr.mxu0 0.0
        %745 = vmatpush1.msra.mxu0 0.0
        %746 = vmatprep.subr.mxu0 0.0
        %747 = vmatpush1.msra.mxu0 %v669
        %748 = vmatprep.subr.mxu0 0.0
        %749 = vmatpush1.msra.mxu0 %v668
        %750 = vmatprep.subr.mxu0 0.0
        %751 = vmatpush2.msra.mxu0 0.0
        %752 = vmatprep.subr.mxu0 0.0
        %753 = vmatpush2.msra.mxu0 0.0
        %754 = vmatprep.subr.mxu0 0.0
        %755 = vmatpush2.msra.mxu0 0.0
        %756 = vmatprep.subr.mxu0 0.0
        %757 = vmatpush2.msra.mxu0 0.0
        %758 = vmatprep.subr.mxu0 0.0
        %759 = vmatpush2.msra.mxu0 0.0
        %760 = vmatprep.subr.mxu0 0.0
        %761 = vmatpush2.msra.mxu0 0.0
        %762 = vmatprep.subr.mxu0 0.0
        %763 = vmatpush2.msra.mxu0 0.0
        %764 = vmatprep.subr.mxu0 0.0
        %765 = vmatpush2.msra.mxu0 0.0
        %766 = vmatprep.subr.mxu0 0.0
        %767 = vmatpush2.msra.mxu0 0.0
        %768 = vmatprep.subr.mxu0 0.0
        %769 = vmatpush2.msra.mxu0 0.0
        %770 = vmatprep.subr.mxu0 0.0
        %771 = vmatpush2.msra.mxu0 0.0
        %772 = vmatprep.subr.mxu0 0.0
        %773 = vmatpush2.msra.mxu0 0.0
        %774 = vmatprep.subr.mxu0 0.0
        %775 = vmatpush2.msra.mxu0 0.0
        %776 = vmatprep.subr.mxu0 0.0
        %777 = vmatpush2.msra.mxu0 0.0
        %778 = vmatprep.subr.mxu0 0.0
        %779 = vmatpush2.msra.mxu0 0.0
        %780 = vmatprep.subr.mxu0 0.0
        %781 = vmatpush2.msra.mxu0 0.0
        %782 = vmatprep.mubr.f32.mxu0 0.0
        %783 = vmatmul.mubr.f32.gmra.mxu0 %v671
        %v784 = vpop.f32.mrf.mxu0
        %v785 = vadd.f32 0.0, %v784
        %v786 = vpop.f32.mrf.mxu0
        %787 = vmatprep.mubr.f32.mxu0 0.0
        %788 = vmatmul.mubr.f32.gmra.mxu0 %v674
        %v789 = vpop.f32.mrf.mxu0
        %v790 = vadd.f32 0.0, %v789
        %v791 = vpop.f32.mrf.mxu0
        %792 = vmatprep.mubr.f32.mxu0 0.0
        %793 = vmatmul.mubr.f32.gmra.mxu0 %v677
        %v794 = vpop.f32.mrf.mxu0
        %v795 = vadd.f32 0.0, %v794
        %v796 = vpop.f32.mrf.mxu0
        %797 = vmatprep.mubr.f32.mxu0 0.0
        %798 = vmatmul.mubr.f32.gmra.mxu0 %v680
        %v799 = vpop.f32.mrf.mxu0
        %v800 = vadd.f32 0.0, %v799
        %v801 = vpop.f32.mrf.mxu0
        %802 = vmatprep.mubr.f32.mxu0 0.0
        %803 = vmatmul.mubr.f32.gmra.mxu0 %v683
        %v804 = vpop.f32.mrf.mxu0
        %v805 = vadd.f32 0.0, %v804
        %v806 = vpop.f32.mrf.mxu0
        %807 = vmatprep.mubr.f32.mxu0 0.0
        %808 = vmatmul.mubr.f32.gmra.mxu0 %v686
        %v809 = vpop.f32.mrf.mxu0
        %v810 = vadd.f32 0.0, %v809
        %v811 = vpop.f32.mrf.mxu0
        %812 = vmatprep.mubr.f32.mxu0 0.0
        %813 = vmatmul.mubr.f32.gmra.mxu0 %v689
        %v814 = vpop.f32.mrf.mxu0
        %v815 = vadd.f32 0.0, %v814
        %v816 = vpop.f32.mrf.mxu0
        %817 = vmatprep.mubr.f32.mxu0 0.0
        %818 = vmatmul.mubr.f32.gmra.mxu0 %v692
        %v819 = vpop.f32.mrf.mxu0
        %v820 = vadd.f32 0.0, %v819
        %v821 = vpop.f32.mrf.mxu0
        %822 = vmatprep.mubr.f32.mxu0 0.0
        %823 = vmatmul.mubr.f32.gmra.mxu0 %v695
        %v824 = vpop.f32.mrf.mxu0
        %v825 = vadd.f32 0.0, %v824
        %v826 = vpop.f32.mrf.mxu0
        %827 = vmatprep.mubr.f32.mxu0 0.0
        %828 = vmatmul.mubr.f32.gmra.mxu0 %v698
        %v829 = vpop.f32.mrf.mxu0
        %v830 = vadd.f32 0.0, %v829
        %v831 = vpop.f32.mrf.mxu0
        %832 = vmatprep.mubr.f32.mxu0 0.0
        %833 = vmatmul.mubr.f32.gmra.mxu0 %v701
        %v834 = vpop.f32.mrf.mxu0
        %v835 = vadd.f32 0.0, %v834
        %v836 = vpop.f32.mrf.mxu0
        %837 = vmatprep.mubr.f32.mxu0 0.0
        %838 = vmatmul.mubr.f32.gmra.mxu0 %v704
        %v839 = vpop.f32.mrf.mxu0
        %v840 = vadd.f32 0.0, %v839
        %v841 = vpop.f32.mrf.mxu0
        %842 = vmatprep.mubr.f32.mxu0 0.0
        %843 = vmatmul.mubr.f32.gmra.mxu0 %v707
        %v844 = vpop.f32.mrf.mxu0
        %v845 = vadd.f32 0.0, %v844
        %v846 = vpop.f32.mrf.mxu0
        %847 = vmatprep.mubr.f32.mxu0 0.0
        %848 = vmatmul.mubr.f32.gmra.mxu0 %v710
        %v849 = vpop.f32.mrf.mxu0
        %v850 = vadd.f32 0.0, %v849
        %v851 = vpop.f32.mrf.mxu0
        %852 = vmatprep.mubr.f32.mxu0 0.0
        %853 = vmatmul.mubr.f32.gmra.mxu0 %v713
        %v854 = vpop.f32.mrf.mxu0
        %v855 = vadd.f32 0.0, %v854
        %v856 = vpop.f32.mrf.mxu0
        %857 = vmatprep.mubr.f32.mxu0 0.0
        %858 = vmatmul.mubr.f32.gmra.mxu0 %v716
        %v859 = vpop.f32.mrf.mxu0
        %v860 = vadd.f32 0.0, %v859
        %v861 = vpop.f32.mrf.mxu0
        %862 = vdwg.mxu0
        %v864 = vsel %vm589, %v633, 0
        %v867 = vsel %vm589, %v634, 0
        %v870 = vsel %vm589, %v635, 0
        %v873 = vsel %vm589, %v636, 0
        %v876 = vsel %vm589, %v637, 0
        %v879 = vsel %vm589, %v638, 0
        %v882 = vsel %vm589, %v639, 0
        %v885 = vsel %vm589, %v640, 0
        %v888 = vsel %vm589, %v641, 0
        %v891 = vsel %vm589, %v642, 0
        %v894 = vsel %vm589, %v643, 0
        %v897 = vsel %vm589, %v644, 0
        %v900 = vsel %vm589, %v645, 0
        %v903 = vsel %vm589, %v646, 0
        %v906 = vsel %vm589, %v647, 0
        %v909 = vsel %vm589, %v648, 0
        %911 = vmatprep.subr.mxu0 0.0
        %912 = vmatpush1.msra.mxu0 0.0
        %913 = vmatprep.subr.mxu0 0.0
        %914 = vmatpush1.msra.mxu0 0.0
        %915 = vmatprep.subr.mxu0 0.0
        %916 = vmatpush1.msra.mxu0 0.0
        %917 = vmatprep.subr.mxu0 0.0
        %918 = vmatpush1.msra.mxu0 0.0
        %919 = vmatprep.subr.mxu0 0.0
        %920 = vmatpush1.msra.mxu0 0.0
        %921 = vmatprep.subr.mxu0 0.0
        %922 = vmatpush1.msra.mxu0 0.0
        %923 = vmatprep.subr.mxu0 0.0
        %924 = vmatpush1.msra.mxu0 0.0
        %925 = vmatprep.subr.mxu0 0.0
        %926 = vmatpush1.msra.mxu0 0.0
        %927 = vmatprep.subr.mxu0 0.0
        %928 = vmatpush1.msra.mxu0 0.0
        %929 = vmatprep.subr.mxu0 0.0
        %930 = vmatpush1.msra.mxu0 0.0
        %931 = vmatprep.subr.mxu0 0.0
        %932 = vmatpush1.msra.mxu0 0.0
        %933 = vmatprep.subr.mxu0 0.0
        %934 = vmatpush1.msra.mxu0 0.0
        %935 = vmatprep.subr.mxu0 0.0
        %936 = vmatpush1.msra.mxu0 0.0
        %937 = vmatprep.subr.mxu0 0.0
        %938 = vmatpush1.msra.mxu0 0.0
        %939 = vmatprep.subr.mxu0 0.0
        %940 = vmatpush1.msra.mxu0 %v650
        %941 = vmatprep.subr.mxu0 0.0
        %942 = vmatpush1.msra.mxu0 %v649
        %943 = vmatprep.subr.mxu0 0.0
        %944 = vmatpush2.msra.mxu0 0.0
        %945 = vmatprep.subr.mxu0 0.0
        %946 = vmatpush2.msra.mxu0 0.0
        %947 = vmatprep.subr.mxu0 0.0
        %948 = vmatpush2.msra.mxu0 0.0
        %949 = vmatprep.subr.mxu0 0.0
        %950 = vmatpush2.msra.mxu0 0.0
        %951 = vmatprep.subr.mxu0 0.0
        %952 = vmatpush2.msra.mxu0 0.0
        %953 = vmatprep.subr.mxu0 0.0
        %954 = vmatpush2.msra.mxu0 0.0
        %955 = vmatprep.subr.mxu0 0.0
        %956 = vmatpush2.msra.mxu0 0.0
        %957 = vmatprep.subr.mxu0 0.0
        %958 = vmatpush2.msra.mxu0 0.0
        %959 = vmatprep.subr.mxu0 0.0
        %960 = vmatpush2.msra.mxu0 0.0
        %961 = vmatprep.subr.mxu0 0.0
        %962 = vmatpush2.msra.mxu0 0.0
        %963 = vmatprep.subr.mxu0 0.0
        %964 = vmatpush2.msra.mxu0 0.0
        %965 = vmatprep.subr.mxu0 0.0
        %966 = vmatpush2.msra.mxu0 0.0
        %967 = vmatprep.subr.mxu0 0.0
        %968 = vmatpush2.msra.mxu0 0.0
        %969 = vmatprep.subr.mxu0 0.0
        %970 = vmatpush2.msra.mxu0 0.0
        %971 = vmatprep.subr.mxu0 0.0
        %972 = vmatpush2.msra.mxu0 0.0
        %973 = vmatprep.subr.mxu0 0.0
        %974 = vmatpush2.msra.mxu0 0.0
        %975 = vmatprep.mubr.f32.mxu0 0.0
        %976 = vmatmul.mubr.f32.gmra.mxu0 %v864
        %v977 = vpop.f32.mrf.mxu0
        %v978 = vadd.f32 %v785, %v977
        %v979 = vpop.f32.mrf.mxu0
        %980 = vmatprep.mubr.f32.mxu0 0.0
        %981 = vmatmul.mubr.f32.gmra.mxu0 %v867
        %v982 = vpop.f32.mrf.mxu0
        %v983 = vadd.f32 %v790, %v982
        %v984 = vpop.f32.mrf.mxu0
        %985 = vmatprep.mubr.f32.mxu0 0.0
        %986 = vmatmul.mubr.f32.gmra.mxu0 %v870
        %v987 = vpop.f32.mrf.mxu0
        %v988 = vadd.f32 %v795, %v987
        %v989 = vpop.f32.mrf.mxu0
        %990 = vmatprep.mubr.f32.mxu0 0.0
        %991 = vmatmul.mubr.f32.gmra.mxu0 %v873
        %v992 = vpop.f32.mrf.mxu0
        %v993 = vadd.f32 %v800, %v992
        %v994 = vpop.f32.mrf.mxu0
        %995 = vmatprep.mubr.f32.mxu0 0.0
        %996 = vmatmul.mubr.f32.gmra.mxu0 %v876
        %v997 = vpop.f32.mrf.mxu0
        %v998 = vadd.f32 %v805, %v997
        %v999 = vpop.f32.mrf.mxu0
        %1000 = vmatprep.mubr.f32.mxu0 0.0
        %1001 = vmatmul.mubr.f32.gmra.mxu0 %v879
        %v1002 = vpop.f32.mrf.mxu0
        %v1003 = vadd.f32 %v810, %v1002
        %v1004 = vpop.f32.mrf.mxu0
        %1005 = vmatprep.mubr.f32.mxu0 0.0
        %1006 = vmatmul.mubr.f32.gmra.mxu0 %v882
        %v1007 = vpop.f32.mrf.mxu0
        %v1008 = vadd.f32 %v815, %v1007
        %v1009 = vpop.f32.mrf.mxu0
        %1010 = vmatprep.mubr.f32.mxu0 0.0
        %1011 = vmatmul.mubr.f32.gmra.mxu0 %v885
        %v1012 = vpop.f32.mrf.mxu0
        %v1013 = vadd.f32 %v820, %v1012
        %v1014 = vpop.f32.mrf.mxu0
        %1015 = vmatprep.mubr.f32.mxu0 0.0
        %1016 = vmatmul.mubr.f32.gmra.mxu0 %v888
        %v1017 = vpop.f32.mrf.mxu0
        %v1018 = vadd.f32 %v825, %v1017
        %v1019 = vpop.f32.mrf.mxu0
        %1020 = vmatprep.mubr.f32.mxu0 0.0
        %1021 = vmatmul.mubr.f32.gmra.mxu0 %v891
        %v1022 = vpop.f32.mrf.mxu0
        %v1023 = vadd.f32 %v830, %v1022
        %v1024 = vpop.f32.mrf.mxu0
        %1025 = vmatprep.mubr.f32.mxu0 0.0
        %1026 = vmatmul.mubr.f32.gmra.mxu0 %v894
        %v1027 = vpop.f32.mrf.mxu0
        %v1028 = vadd.f32 %v835, %v1027
        %v1029 = vpop.f32.mrf.mxu0
        %1030 = vmatprep.mubr.f32.mxu0 0.0
        %1031 = vmatmul.mubr.f32.gmra.mxu0 %v897
        %v1032 = vpop.f32.mrf.mxu0
        %v1033 = vadd.f32 %v840, %v1032
        %v1034 = vpop.f32.mrf.mxu0
        %1035 = vmatprep.mubr.f32.mxu0 0.0
        %1036 = vmatmul.mubr.f32.gmra.mxu0 %v900
        %v1037 = vpop.f32.mrf.mxu0
        %v1038 = vadd.f32 %v845, %v1037
        %v1039 = vpop.f32.mrf.mxu0
        %1040 = vmatprep.mubr.f32.mxu0 0.0
        %1041 = vmatmul.mubr.f32.gmra.mxu0 %v903
        %v1042 = vpop.f32.mrf.mxu0
        %v1043 = vadd.f32 %v850, %v1042
        %v1044 = vpop.f32.mrf.mxu0
        %1045 = vmatprep.mubr.f32.mxu0 0.0
        %1046 = vmatmul.mubr.f32.gmra.mxu0 %v906
        %v1047 = vpop.f32.mrf.mxu0
        %v1048 = vadd.f32 %v855, %v1047
        %v1049 = vpop.f32.mrf.mxu0
        %1050 = vmatprep.mubr.f32.mxu0 0.0
        %1051 = vmatmul.mubr.f32.gmra.mxu0 %v909
        %v1052 = vpop.f32.mrf.mxu0
        %v1053 = vadd.f32 %v860, %v1052
        %v1054 = vpop.f32.mrf.mxu0
        %1055 = vdwg.mxu0
        %s1056 = scalar_lea.vmem [#allocation2], 32
        %v1057 = vld [vmem:[%s1056] sm:$0xff]
        %v1058 = vld [vmem:[%s1056 + $0x8] sm:$0xff]
        %v1059 = vld [vmem:[%s1056 + $0x10] sm:$0xff]
        %v1060 = vld [vmem:[%s1056 + $0x18] sm:$0xff]
        %v1061 = vld [vmem:[%s1056 + $0x20] sm:$0xff]
        %v1062 = vld [vmem:[%s1056 + $0x28] sm:$0xff]
        %v1063 = vld [vmem:[%s1056 + $0x30] sm:$0xff]
        %v1064 = vld [vmem:[%s1056 + $0x38] sm:$0xff]
        %v1065 = vld [vmem:[%s1056 + $0x40] sm:$0xff]
        %v1066 = vld [vmem:[%s1056 + $0x48] sm:$0xff]
        %v1067 = vld [vmem:[%s1056 + $0x50] sm:$0xff]
        %v1068 = vld [vmem:[%s1056 + $0x58] sm:$0xff]
        %v1069 = vld [vmem:[%s1056 + $0x60] sm:$0xff]
        %v1070 = vld [vmem:[%s1056 + $0x68] sm:$0xff]
        %v1071 = vld [vmem:[%s1056 + $0x70] sm:$0xff]
        %v1072 = vld [vmem:[%s1056 + $0x78] sm:$0xff]
        %s1073 = scalar_lea.vmem [#allocation8], 32
        %v1074 = vld [vmem:[%s1073] sm:$0xff]
        %v1075 = vld [vmem:[%s1073 + $0x8] sm:$0xff]
        %v1077 = vsel %vm589, %v1057, 0
        %v1080 = vsel %vm589, %v1058, 0
        %v1083 = vsel %vm589, %v1059, 0
        %v1086 = vsel %vm589, %v1060, 0
        %v1089 = vsel %vm589, %v1061, 0
        %v1092 = vsel %vm589, %v1062, 0
        %v1095 = vsel %vm589, %v1063, 0
        %v1098 = vsel %vm589, %v1064, 0
        %v1101 = vsel %vm589, %v1065, 0
        %v1104 = vsel %vm589, %v1066, 0
        %v1107 = vsel %vm589, %v1067, 0
        %v1110 = vsel %vm589, %v1068, 0
        %v1113 = vsel %vm589, %v1069, 0
        %v1116 = vsel %vm589, %v1070, 0
        %v1119 = vsel %vm589, %v1071, 0
        %v1122 = vsel %vm589, %v1072, 0
        %1124 = vmatprep.subr.mxu0 0.0
        %1125 = vmatpush1.msra.mxu0 0.0
        %1126 = vmatprep.subr.mxu0 0.0
        %1127 = vmatpush1.msra.mxu0 0.0
        %1128 = vmatprep.subr.mxu0 0.0
        %1129 = vmatpush1.msra.mxu0 0.0
        %1130 = vmatprep.subr.mxu0 0.0
        %1131 = vmatpush1.msra.mxu0 0.0
        %1132 = vmatprep.subr.mxu0 0.0
        %1133 = vmatpush1.msra.mxu0 0.0
        %1134 = vmatprep.subr.mxu0 0.0
        %1135 = vmatpush1.msra.mxu0 0.0
        %1136 = vmatprep.subr.mxu0 0.0
        %1137 = vmatpush1.msra.mxu0 0.0
        %1138 = vmatprep.subr.mxu0 0.0
        %1139 = vmatpush1.msra.mxu0 0.0
        %1140 = vmatprep.subr.mxu0 0.0
        %1141 = vmatpush1.msra.mxu0 0.0
        %1142 = vmatprep.subr.mxu0 0.0
        %1143 = vmatpush1.msra.mxu0 0.0
        %1144 = vmatprep.subr.mxu0 0.0
        %1145 = vmatpush1.msra.mxu0 0.0
        %1146 = vmatprep.subr.mxu0 0.0
        %1147 = vmatpush1.msra.mxu0 0.0
        %1148 = vmatprep.subr.mxu0 0.0
        %1149 = vmatpush1.msra.mxu0 0.0
        %1150 = vmatprep.subr.mxu0 0.0
        %1151 = vmatpush1.msra.mxu0 0.0
        %1152 = vmatprep.subr.mxu0 0.0
        %1153 = vmatpush1.msra.mxu0 %v1075
        %1154 = vmatprep.subr.mxu0 0.0
        %1155 = vmatpush1.msra.mxu0 %v1074
        %1156 = vmatprep.subr.mxu0 0.0
        %1157 = vmatpush2.msra.mxu0 0.0
        %1158 = vmatprep.subr.mxu0 0.0
        %1159 = vmatpush2.msra.mxu0 0.0
        %1160 = vmatprep.subr.mxu0 0.0
        %1161 = vmatpush2.msra.mxu0 0.0
        %1162 = vmatprep.subr.mxu0 0.0
        %1163 = vmatpush2.msra.mxu0 0.0
        %1164 = vmatprep.subr.mxu0 0.0
        %1165 = vmatpush2.msra.mxu0 0.0
        %1166 = vmatprep.subr.mxu0 0.0
        %1167 = vmatpush2.msra.mxu0 0.0
        %1168 = vmatprep.subr.mxu0 0.0
        %1169 = vmatpush2.msra.mxu0 0.0
        %1170 = vmatprep.subr.mxu0 0.0
        %1171 = vmatpush2.msra.mxu0 0.0
        %1172 = vmatprep.subr.mxu0 0.0
        %1173 = vmatpush2.msra.mxu0 0.0
        %1174 = vmatprep.subr.mxu0 0.0
        %1175 = vmatpush2.msra.mxu0 0.0
        %1176 = vmatprep.subr.mxu0 0.0
        %1177 = vmatpush2.msra.mxu0 0.0
        %1178 = vmatprep.subr.mxu0 0.0
        %1179 = vmatpush2.msra.mxu0 0.0
        %1180 = vmatprep.subr.mxu0 0.0
        %1181 = vmatpush2.msra.mxu0 0.0
        %1182 = vmatprep.subr.mxu0 0.0
        %1183 = vmatpush2.msra.mxu0 0.0
        %1184 = vmatprep.subr.mxu0 0.0
        %1185 = vmatpush2.msra.mxu0 0.0
        %1186 = vmatprep.subr.mxu0 0.0
        %1187 = vmatpush2.msra.mxu0 0.0
        %1188 = vmatprep.mubr.f32.mxu0 0.0
        %1189 = vmatmul.mubr.f32.gmra.mxu0 %v1077
        %v1190 = vpop.f32.mrf.mxu0
        %v1191 = vadd.f32 0.0, %v1190
        %v1192 = vpop.f32.mrf.mxu0
        %1193 = vmatprep.mubr.f32.mxu0 0.0
        %1194 = vmatmul.mubr.f32.gmra.mxu0 %v1080
        %v1195 = vpop.f32.mrf.mxu0
        %v1196 = vadd.f32 0.0, %v1195
        %v1197 = vpop.f32.mrf.mxu0
        %1198 = vmatprep.mubr.f32.mxu0 0.0
        %1199 = vmatmul.mubr.f32.gmra.mxu0 %v1083
        %v1200 = vpop.f32.mrf.mxu0
        %v1201 = vadd.f32 0.0, %v1200
        %v1202 = vpop.f32.mrf.mxu0
        %1203 = vmatprep.mubr.f32.mxu0 0.0
        %1204 = vmatmul.mubr.f32.gmra.mxu0 %v1086
        %v1205 = vpop.f32.mrf.mxu0
        %v1206 = vadd.f32 0.0, %v1205
        %v1207 = vpop.f32.mrf.mxu0
        %1208 = vmatprep.mubr.f32.mxu0 0.0
        %1209 = vmatmul.mubr.f32.gmra.mxu0 %v1089
        %v1210 = vpop.f32.mrf.mxu0
        %v1211 = vadd.f32 0.0, %v1210
        %v1212 = vpop.f32.mrf.mxu0
        %1213 = vmatprep.mubr.f32.mxu0 0.0
        %1214 = vmatmul.mubr.f32.gmra.mxu0 %v1092
        %v1215 = vpop.f32.mrf.mxu0
        %v1216 = vadd.f32 0.0, %v1215
        %v1217 = vpop.f32.mrf.mxu0
        %1218 = vmatprep.mubr.f32.mxu0 0.0
        %1219 = vmatmul.mubr.f32.gmra.mxu0 %v1095
        %v1220 = vpop.f32.mrf.mxu0
        %v1221 = vadd.f32 0.0, %v1220
        %v1222 = vpop.f32.mrf.mxu0
        %1223 = vmatprep.mubr.f32.mxu0 0.0
        %1224 = vmatmul.mubr.f32.gmra.mxu0 %v1098
        %v1225 = vpop.f32.mrf.mxu0
        %v1226 = vadd.f32 0.0, %v1225
        %v1227 = vpop.f32.mrf.mxu0
        %1228 = vmatprep.mubr.f32.mxu0 0.0
        %1229 = vmatmul.mubr.f32.gmra.mxu0 %v1101
        %v1230 = vpop.f32.mrf.mxu0
        %v1231 = vadd.f32 0.0, %v1230
        %v1232 = vpop.f32.mrf.mxu0
        %1233 = vmatprep.mubr.f32.mxu0 0.0
        %1234 = vmatmul.mubr.f32.gmra.mxu0 %v1104
        %v1235 = vpop.f32.mrf.mxu0
        %v1236 = vadd.f32 0.0, %v1235
        %v1237 = vpop.f32.mrf.mxu0
        %1238 = vmatprep.mubr.f32.mxu0 0.0
        %1239 = vmatmul.mubr.f32.gmra.mxu0 %v1107
        %v1240 = vpop.f32.mrf.mxu0
        %v1241 = vadd.f32 0.0, %v1240
        %v1242 = vpop.f32.mrf.mxu0
        %1243 = vmatprep.mubr.f32.mxu0 0.0
        %1244 = vmatmul.mubr.f32.gmra.mxu0 %v1110
        %v1245 = vpop.f32.mrf.mxu0
        %v1246 = vadd.f32 0.0, %v1245
        %v1247 = vpop.f32.mrf.mxu0
        %1248 = vmatprep.mubr.f32.mxu0 0.0
        %1249 = vmatmul.mubr.f32.gmra.mxu0 %v1113
        %v1250 = vpop.f32.mrf.mxu0
        %v1251 = vadd.f32 0.0, %v1250
        %v1252 = vpop.f32.mrf.mxu0
        %1253 = vmatprep.mubr.f32.mxu0 0.0
        %1254 = vmatmul.mubr.f32.gmra.mxu0 %v1116
        %v1255 = vpop.f32.mrf.mxu0
        %v1256 = vadd.f32 0.0, %v1255
        %v1257 = vpop.f32.mrf.mxu0
        %1258 = vmatprep.mubr.f32.mxu0 0.0
        %1259 = vmatmul.mubr.f32.gmra.mxu0 %v1119
        %v1260 = vpop.f32.mrf.mxu0
        %v1261 = vadd.f32 0.0, %v1260
        %v1262 = vpop.f32.mrf.mxu0
        %1263 = vmatprep.mubr.f32.mxu0 0.0
        %1264 = vmatmul.mubr.f32.gmra.mxu0 %v1122
        %v1265 = vpop.f32.mrf.mxu0
        %v1266 = vadd.f32 0.0, %v1265
        %v1267 = vpop.f32.mrf.mxu0
        %1268 = vdwg.mxu0
        %v1269 = vadd.f32 %v978, %v1191
        %v1270 = vadd.f32 %v983, %v1196
        %v1271 = vadd.f32 %v988, %v1201
        %v1272 = vadd.f32 %v993, %v1206
        %v1273 = vadd.f32 %v998, %v1211
        %v1274 = vadd.f32 %v1003, %v1216
        %v1275 = vadd.f32 %v1008, %v1221
        %v1276 = vadd.f32 %v1013, %v1226
        %v1277 = vadd.f32 %v1018, %v1231
        %v1278 = vadd.f32 %v1023, %v1236
        %v1279 = vadd.f32 %v1028, %v1241
        %v1280 = vadd.f32 %v1033, %v1246
        %v1281 = vadd.f32 %v1038, %v1251
        %v1282 = vadd.f32 %v1043, %v1256
        %v1283 = vadd.f32 %v1048, %v1261
        %v1284 = vadd.f32 %v1053, %v1266
        %v1285 = vlaneseq
        %v1286 = vshrl.u32 %v1285, 7
        %v1287 = vadd.s32 %v1286, 8
        %vm1288 = vcmp.eq.s32.totalorder %v1286, 0
        %vm1289 = vcmp.eq.s32.totalorder %v1287, 0
        %v1290 = vrot.slane %v1269, 7
        %v1291 = vrot.slane %v1270, 7
        %v1292 = vrot.slane %v1271, 7
        %v1293 = vrot.slane %v1272, 7
        %v1294 = vrot.slane %v1273, 7
        %v1295 = vrot.slane %v1274, 7
        %v1296 = vrot.slane %v1275, 7
        %v1297 = vrot.slane %v1276, 7
        %v1298 = vrot.slane %v1277, 7
        %v1299 = vrot.slane %v1278, 7
        %v1300 = vrot.slane %v1279, 7
        %v1301 = vrot.slane %v1280, 7
        %v1302 = vrot.slane %v1281, 7
        %v1303 = vrot.slane %v1282, 7
        %v1304 = vrot.slane %v1283, 7
        %v1305 = vrot.slane %v1284, 7
        %vm1306 = vcmp.lt.s32.totalorder %v1286, 1
        %v1307 = vsel %vm1306, %v1304, %v1305
        %v1308 = vsel %vm1306, %v1303, %v1304
        %v1309 = vsel %vm1306, %v1302, %v1303
        %v1310 = vsel %vm1306, %v1301, %v1302
        %v1311 = vsel %vm1306, %v1300, %v1301
        %v1312 = vsel %vm1306, %v1299, %v1300
        %v1313 = vsel %vm1306, %v1298, %v1299
        %v1314 = vsel %vm1306, %v1297, %v1298
        %v1315 = vsel %vm1306, %v1296, %v1297
        %v1316 = vsel %vm1306, %v1295, %v1296
        %v1317 = vsel %vm1306, %v1294, %v1295
        %v1318 = vsel %vm1306, %v1293, %v1294
        %v1319 = vsel %vm1306, %v1292, %v1293
        %v1320 = vsel %vm1306, %v1291, %v1292
        %v1321 = vsel %vm1306, %v1290, %v1291
        %v1322 = vsel %vm1306, %v1305, %v1290
        %v1323 = vsel %vm1288, 1, 0
        %v1324 = vsel %vm1289, 1, 0
        %vm1325 = vcmp.eq.s32.totalorder %v1323, 1
        %vm1326 = vcmp.eq.s32.totalorder %v1324, 1
        %v1327 = vsel %vm1325, 0.0, %v1322
        %v1328 = vsel %vm1326, 0.0, %v1321
        %v1329 = vsel %vm1325, 0.0, %v1320
        %v1330 = vsel %vm1326, 0.0, %v1319
        %v1331 = vsel %vm1325, 0.0, %v1318
        %v1332 = vsel %vm1326, 0.0, %v1317
        %v1333 = vsel %vm1325, 0.0, %v1316
        %v1334 = vsel %vm1326, 0.0, %v1315
        %v1335 = vsel %vm1325, 0.0, %v1314
        %v1336 = vsel %vm1326, 0.0, %v1313
        %v1337 = vsel %vm1325, 0.0, %v1312
        %v1338 = vsel %vm1326, 0.0, %v1311
        %v1339 = vsel %vm1325, 0.0, %v1310
        %v1340 = vsel %vm1326, 0.0, %v1309
        %v1341 = vsel %vm1325, 0.0, %v1308
        %v1342 = vsel %vm1326, 0.0, %v1307
        %vm1343 = vcmp.eq.s32.totalorder %v1286, 15
        %vm1344 = vcmp.eq.s32.totalorder %v1287, 15
        %1361 = vrot.lane.b32.xlu0 %v1269, 120
        %v1362 = vpop.permute.xlu0 %1361
        %1363 = vrot.lane.b32.xlu0 %v1270, 120
        %v1364 = vpop.permute.xlu0 %1363
        %1365 = vrot.lane.b32.xlu0 %v1271, 120
        %v1366 = vpop.permute.xlu0 %1365
        %1367 = vrot.lane.b32.xlu0 %v1272, 120
        %v1368 = vpop.permute.xlu0 %1367
        %1369 = vrot.lane.b32.xlu0 %v1273, 120
        %v1370 = vpop.permute.xlu0 %1369
        %1371 = vrot.lane.b32.xlu0 %v1274, 120
        %v1372 = vpop.permute.xlu0 %1371
        %1373 = vrot.lane.b32.xlu0 %v1275, 120
        %v1374 = vpop.permute.xlu0 %1373
        %1375 = vrot.lane.b32.xlu0 %v1276, 120
        %v1376 = vpop.permute.xlu0 %1375
        %1377 = vrot.lane.b32.xlu0 %v1277, 120
        %v1378 = vpop.permute.xlu0 %1377
        %1379 = vrot.lane.b32.xlu0 %v1278, 120
        %v1380 = vpop.permute.xlu0 %1379
        %1381 = vrot.lane.b32.xlu0 %v1279, 120
        %v1382 = vpop.permute.xlu0 %1381
        %1383 = vrot.lane.b32.xlu0 %v1280, 120
        %v1384 = vpop.permute.xlu0 %1383
        %1385 = vrot.lane.b32.xlu0 %v1281, 120
        %v1386 = vpop.permute.xlu0 %1385
        %1387 = vrot.lane.b32.xlu0 %v1282, 120
        %v1388 = vpop.permute.xlu0 %1387
        %1389 = vrot.lane.b32.xlu0 %v1283, 120
        %v1390 = vpop.permute.xlu0 %1389
        %1391 = vrot.lane.b32.xlu0 %v1284, 120
        %v1392 = vpop.permute.xlu0 %1391
        %v1409 = vrot.slane %v1362, 1
        %v1410 = vrot.slane %v1364, 1
        %v1411 = vrot.slane %v1366, 1
        %v1412 = vrot.slane %v1368, 1
        %v1413 = vrot.slane %v1370, 1
        %v1414 = vrot.slane %v1372, 1
        %v1415 = vrot.slane %v1374, 1
        %v1416 = vrot.slane %v1376, 1
        %v1417 = vrot.slane %v1378, 1
        %v1418 = vrot.slane %v1380, 1
        %v1419 = vrot.slane %v1382, 1
        %v1420 = vrot.slane %v1384, 1
        %v1421 = vrot.slane %v1386, 1
        %v1422 = vrot.slane %v1388, 1
        %v1423 = vrot.slane %v1390, 1
        %v1424 = vrot.slane %v1392, 1
        %vm1425 = vcmp.lt.s32.totalorder %v1286, 7
        %v1426 = vsel %vm1425, %v1423, %v1424
        %v1427 = vsel %vm1425, %v1422, %v1423
        %v1428 = vsel %vm1425, %v1421, %v1422
        %v1429 = vsel %vm1425, %v1420, %v1421
        %v1430 = vsel %vm1425, %v1419, %v1420
        %v1431 = vsel %vm1425, %v1418, %v1419
        %v1432 = vsel %vm1425, %v1417, %v1418
        %v1433 = vsel %vm1425, %v1416, %v1417
        %v1434 = vsel %vm1425, %v1415, %v1416
        %v1435 = vsel %vm1425, %v1414, %v1415
        %v1436 = vsel %vm1425, %v1413, %v1414
        %v1437 = vsel %vm1425, %v1412, %v1413
        %v1438 = vsel %vm1425, %v1411, %v1412
        %v1439 = vsel %vm1425, %v1410, %v1411
        %v1440 = vsel %vm1425, %v1409, %v1410
        %v1441 = vsel %vm1425, %v1424, %v1409
        %v1442 = vsel %vm1343, 1, 0
        %v1443 = vsel %vm1344, 1, 0
        %vm1444 = vcmp.eq.s32.totalorder %v1442, 1
        %vm1445 = vcmp.eq.s32.totalorder %v1443, 1
        %v1446 = vsel %vm1444, 0.0, %v1440
        %v1447 = vsel %vm1445, 0.0, %v1439
        %v1448 = vsel %vm1444, 0.0, %v1438
        %v1449 = vsel %vm1445, 0.0, %v1437
        %v1450 = vsel %vm1444, 0.0, %v1436
        %v1451 = vsel %vm1445, 0.0, %v1435
        %v1452 = vsel %vm1444, 0.0, %v1434
        %v1453 = vsel %vm1445, 0.0, %v1433
        %v1454 = vsel %vm1444, 0.0, %v1432
        %v1455 = vsel %vm1445, 0.0, %v1431
        %v1456 = vsel %vm1444, 0.0, %v1430
        %v1457 = vsel %vm1445, 0.0, %v1429
        %v1458 = vsel %vm1444, 0.0, %v1428
        %v1459 = vsel %vm1445, 0.0, %v1427
        %v1460 = vsel %vm1444, 0.0, %v1426
        %v1461 = vsel %vm1445, 0.0, %v1441
        %1478 = vrot.lane.b32.xlu0 %v1327, 4
        %v1479 = vpop.permute.xlu0 %1478
        %1480 = vrot.lane.b32.xlu0 %v1328, 4
        %v1481 = vpop.permute.xlu0 %1480
        %1482 = vrot.lane.b32.xlu0 %v1329, 4
        %v1483 = vpop.permute.xlu0 %1482
        %1484 = vrot.lane.b32.xlu0 %v1330, 4
        %v1485 = vpop.permute.xlu0 %1484
        %1486 = vrot.lane.b32.xlu0 %v1331, 4
        %v1487 = vpop.permute.xlu0 %1486
        %1488 = vrot.lane.b32.xlu0 %v1332, 4
        %v1489 = vpop.permute.xlu0 %1488
        %1490 = vrot.lane.b32.xlu0 %v1333, 4
        %v1491 = vpop.permute.xlu0 %1490
        %1492 = vrot.lane.b32.xlu0 %v1334, 4
        %v1493 = vpop.permute.xlu0 %1492
        %1494 = vrot.lane.b32.xlu0 %v1335, 4
        %v1495 = vpop.permute.xlu0 %1494
        %1496 = vrot.lane.b32.xlu0 %v1336, 4
        %v1497 = vpop.permute.xlu0 %1496
        %1498 = vrot.lane.b32.xlu0 %v1337, 4
        %v1499 = vpop.permute.xlu0 %1498
        %1500 = vrot.lane.b32.xlu0 %v1338, 4
        %v1501 = vpop.permute.xlu0 %1500
        %1502 = vrot.lane.b32.xlu0 %v1339, 4
        %v1503 = vpop.permute.xlu0 %1502
        %1504 = vrot.lane.b32.xlu0 %v1340, 4
        %v1505 = vpop.permute.xlu0 %1504
        %1506 = vrot.lane.b32.xlu0 %v1341, 4
        %v1507 = vpop.permute.xlu0 %1506
        %1508 = vrot.lane.b32.xlu0 %v1342, 4
        %v1509 = vpop.permute.xlu0 %1508
        %v1526 = vadd.f32 %v1269, %v1479
        %v1527 = vadd.f32 %v1270, %v1481
        %v1528 = vadd.f32 %v1271, %v1483
        %v1529 = vadd.f32 %v1272, %v1485
        %v1530 = vadd.f32 %v1273, %v1487
        %v1531 = vadd.f32 %v1274, %v1489
        %v1532 = vadd.f32 %v1275, %v1491
        %v1533 = vadd.f32 %v1276, %v1493
        %v1534 = vadd.f32 %v1277, %v1495
        %v1535 = vadd.f32 %v1278, %v1497
        %v1536 = vadd.f32 %v1279, %v1499
        %v1537 = vadd.f32 %v1280, %v1501
        %v1538 = vadd.f32 %v1281, %v1503
        %v1539 = vadd.f32 %v1282, %v1505
        %v1540 = vadd.f32 %v1283, %v1507
        %v1541 = vadd.f32 %v1284, %v1509
        %1558 = vrot.lane.b32.xlu0 %v1446, 4
        %v1559 = vpop.permute.xlu0 %1558
        %1560 = vrot.lane.b32.xlu0 %v1447, 4
        %v1561 = vpop.permute.xlu0 %1560
        %1562 = vrot.lane.b32.xlu0 %v1448, 4
        %v1563 = vpop.permute.xlu0 %1562
        %1564 = vrot.lane.b32.xlu0 %v1449, 4
        %v1565 = vpop.permute.xlu0 %1564
        %1566 = vrot.lane.b32.xlu0 %v1450, 4
        %v1567 = vpop.permute.xlu0 %1566
        %1568 = vrot.lane.b32.xlu0 %v1451, 4
        %v1569 = vpop.permute.xlu0 %1568
        %1570 = vrot.lane.b32.xlu0 %v1452, 4
        %v1571 = vpop.permute.xlu0 %1570
        %1572 = vrot.lane.b32.xlu0 %v1453, 4
        %v1573 = vpop.permute.xlu0 %1572
        %1574 = vrot.lane.b32.xlu0 %v1454, 4
        %v1575 = vpop.permute.xlu0 %1574
        %1576 = vrot.lane.b32.xlu0 %v1455, 4
        %v1577 = vpop.permute.xlu0 %1576
        %1578 = vrot.lane.b32.xlu0 %v1456, 4
        %v1579 = vpop.permute.xlu0 %1578
        %1580 = vrot.lane.b32.xlu0 %v1457, 4
        %v1581 = vpop.permute.xlu0 %1580
        %1582 = vrot.lane.b32.xlu0 %v1458, 4
        %v1583 = vpop.permute.xlu0 %1582
        %1584 = vrot.lane.b32.xlu0 %v1459, 4
        %v1585 = vpop.permute.xlu0 %1584
        %1586 = vrot.lane.b32.xlu0 %v1460, 4
        %v1587 = vpop.permute.xlu0 %1586
        %1588 = vrot.lane.b32.xlu0 %v1461, 4
        %v1589 = vpop.permute.xlu0 %1588
        %v1606 = vadd.f32 %v1526, %v1559
        %v1607 = vadd.f32 %v1527, %v1561
        %v1608 = vadd.f32 %v1528, %v1563
        %v1609 = vadd.f32 %v1529, %v1565
        %v1610 = vadd.f32 %v1530, %v1567
        %v1611 = vadd.f32 %v1531, %v1569
        %v1612 = vadd.f32 %v1532, %v1571
        %v1613 = vadd.f32 %v1533, %v1573
        %v1614 = vadd.f32 %v1534, %v1575
        %v1615 = vadd.f32 %v1535, %v1577
        %v1616 = vadd.f32 %v1536, %v1579
        %v1617 = vadd.f32 %v1537, %v1581
        %v1618 = vadd.f32 %v1538, %v1583
        %v1619 = vadd.f32 %v1539, %v1585
        %v1620 = vadd.f32 %v1540, %v1587
        %v1621 = vadd.f32 %v1541, %v1589
        %v1622 = vld [vmem:[#allocation10] sm:$0x1]
        %v1624 = vlaneseq
        %v1625 = vshrl.u32 %v1624, 7
        %v1626 = vsub.s32 0, %v1625
        %v1627 = vrot.slane %v1622, %v1626
        %1628 = vrot.lane.b32.xlu0 %v1627, 4
        %v1629 = vpop.permute.xlu0 %1628
        %v1631 = vadd.f32 %v1606, %v1629
        %v1632 = vadd.f32 %v1607, %v1629
        %v1633 = vadd.f32 %v1608, %v1629
        %v1634 = vadd.f32 %v1609, %v1629
        %v1635 = vadd.f32 %v1610, %v1629
        %v1636 = vadd.f32 %v1611, %v1629
        %v1637 = vadd.f32 %v1612, %v1629
        %v1638 = vadd.f32 %v1613, %v1629
        %v1639 = vadd.f32 %v1614, %v1629
        %v1640 = vadd.f32 %v1615, %v1629
        %v1641 = vadd.f32 %v1616, %v1629
        %v1642 = vadd.f32 %v1617, %v1629
        %v1643 = vadd.f32 %v1618, %v1629
        %v1644 = vadd.f32 %v1619, %v1629
        %v1645 = vadd.f32 %v1620, %v1629
        %v1646 = vadd.f32 %v1621, %v1629
        %v1647 = vmax.f32 %v1631, 0.0
        %v1648 = vmax.f32 %v1632, 0.0
        %v1649 = vmax.f32 %v1633, 0.0
        %v1650 = vmax.f32 %v1634, 0.0
        %v1651 = vmax.f32 %v1635, 0.0
        %v1652 = vmax.f32 %v1636, 0.0
        %v1653 = vmax.f32 %v1637, 0.0
        %v1654 = vmax.f32 %v1638, 0.0
        %v1655 = vmax.f32 %v1639, 0.0
        %v1656 = vmax.f32 %v1640, 0.0
        %v1657 = vmax.f32 %v1641, 0.0
        %v1658 = vmax.f32 %v1642, 0.0
        %v1659 = vmax.f32 %v1643, 0.0
        %v1660 = vmax.f32 %v1644, 0.0
        %v1661 = vmax.f32 %v1645, 0.0
        %v1662 = vmax.f32 %v1646, 0.0
        %v1663 = vld [vmem:[#allocation11] sm:$0xf]
        %v1664 = vld [vmem:[#allocation13] sm:$0x1]
        %v1666 = vlaneseq
        %v1667 = vshrl.u32 %v1666, 7
        %v1668 = vsub.s32 0, %v1667
        %v1669 = vrot.slane %v1664, %v1668
        %1687 = vrot.lane.b32.xlu0 %v1647, 124
        %v1688 = vpop.permute.xlu0 %1687
        %1689 = vrot.lane.b32.xlu0 %v1648, 124
        %v1690 = vpop.permute.xlu0 %1689
        %1691 = vrot.lane.b32.xlu0 %v1649, 124
        %v1692 = vpop.permute.xlu0 %1691
        %1693 = vrot.lane.b32.xlu0 %v1650, 124
        %v1694 = vpop.permute.xlu0 %1693
        %1695 = vrot.lane.b32.xlu0 %v1651, 124
        %v1696 = vpop.permute.xlu0 %1695
        %1697 = vrot.lane.b32.xlu0 %v1652, 124
        %v1698 = vpop.permute.xlu0 %1697
        %1699 = vrot.lane.b32.xlu0 %v1653, 124
        %v1700 = vpop.permute.xlu0 %1699
        %1701 = vrot.lane.b32.xlu0 %v1654, 124
        %v1702 = vpop.permute.xlu0 %1701
        %1703 = vrot.lane.b32.xlu0 %v1655, 124
        %v1704 = vpop.permute.xlu0 %1703
        %1705 = vrot.lane.b32.xlu0 %v1656, 124
        %v1706 = vpop.permute.xlu0 %1705
        %1707 = vrot.lane.b32.xlu0 %v1657, 124
        %v1708 = vpop.permute.xlu0 %1707
        %1709 = vrot.lane.b32.xlu0 %v1658, 124
        %v1710 = vpop.permute.xlu0 %1709
        %1711 = vrot.lane.b32.xlu0 %v1659, 124
        %v1712 = vpop.permute.xlu0 %1711
        %1713 = vrot.lane.b32.xlu0 %v1660, 124
        %v1714 = vpop.permute.xlu0 %1713
        %1715 = vrot.lane.b32.xlu0 %v1661, 124
        %v1716 = vpop.permute.xlu0 %1715
        %1717 = vrot.lane.b32.xlu0 %v1662, 124
        %v1718 = vpop.permute.xlu0 %1717
        %vm1719 = vcmask 31744
        %v1720 = vsel %vm1719, %v1688, 0
        %v1722 = vsel %vm1719, %v1690, 0
        %v1724 = vsel %vm1719, %v1692, 0
        %v1726 = vsel %vm1719, %v1694, 0
        %v1728 = vsel %vm1719, %v1696, 0
        %v1730 = vsel %vm1719, %v1698, 0
        %v1732 = vsel %vm1719, %v1700, 0
        %v1734 = vsel %vm1719, %v1702, 0
        %v1736 = vsel %vm1719, %v1704, 0
        %v1738 = vsel %vm1719, %v1706, 0
        %v1740 = vsel %vm1719, %v1708, 0
        %v1742 = vsel %vm1719, %v1710, 0
        %v1744 = vsel %vm1719, %v1712, 0
        %v1746 = vsel %vm1719, %v1714, 0
        %v1748 = vsel %vm1719, %v1716, 0
        %v1750 = vsel %vm1719, %v1718, 0
        %vm1752 = vcmask 1043456
        %v1754 = vsel %vm1752, %v1663, 0
        %1756 = vmatprep.subr.mxu0 0.0
        %1757 = vmatpush1.msra.mxu0 0.0
        %1758 = vmatprep.subr.mxu0 0.0
        %1759 = vmatpush1.msra.mxu0 0.0
        %1760 = vmatprep.subr.mxu0 0.0
        %1761 = vmatpush1.msra.mxu0 0.0
        %1762 = vmatprep.subr.mxu0 0.0
        %1763 = vmatpush1.msra.mxu0 0.0
        %1764 = vmatprep.subr.mxu0 0.0
        %1765 = vmatpush1.msra.mxu0 0.0
        %1766 = vmatprep.subr.mxu0 0.0
        %1767 = vmatpush1.msra.mxu0 0.0
        %1768 = vmatprep.subr.mxu0 0.0
        %1769 = vmatpush1.msra.mxu0 0.0
        %1770 = vmatprep.subr.mxu0 0.0
        %1771 = vmatpush1.msra.mxu0 0.0
        %1772 = vmatprep.subr.mxu0 0.0
        %1773 = vmatpush1.msra.mxu0 0.0
        %1774 = vmatprep.subr.mxu0 0.0
        %1775 = vmatpush1.msra.mxu0 0.0
        %1776 = vmatprep.subr.mxu0 0.0
        %1777 = vmatpush1.msra.mxu0 0.0
        %1778 = vmatprep.subr.mxu0 0.0
        %1779 = vmatpush1.msra.mxu0 0.0
        %1780 = vmatprep.subr.mxu0 0.0
        %1781 = vmatpush1.msra.mxu0 0.0
        %1782 = vmatprep.subr.mxu0 0.0
        %1783 = vmatpush1.msra.mxu0 0.0
        %1784 = vmatprep.subr.mxu0 0.0
        %1785 = vmatpush1.msra.mxu0 0.0
        %1786 = vmatprep.subr.mxu0 0.0
        %1787 = vmatpush1.msra.mxu0 %v1754
        %1788 = vmatprep.subr.mxu0 0.0
        %1789 = vmatpush2.msra.mxu0 0.0
        %1790 = vmatprep.subr.mxu0 0.0
        %1791 = vmatpush2.msra.mxu0 0.0
        %1792 = vmatprep.subr.mxu0 0.0
        %1793 = vmatpush2.msra.mxu0 0.0
        %1794 = vmatprep.subr.mxu0 0.0
        %1795 = vmatpush2.msra.mxu0 0.0
        %1796 = vmatprep.subr.mxu0 0.0
        %1797 = vmatpush2.msra.mxu0 0.0
        %1798 = vmatprep.subr.mxu0 0.0
        %1799 = vmatpush2.msra.mxu0 0.0
        %1800 = vmatprep.subr.mxu0 0.0
        %1801 = vmatpush2.msra.mxu0 0.0
        %1802 = vmatprep.subr.mxu0 0.0
        %1803 = vmatpush2.msra.mxu0 0.0
        %1804 = vmatprep.subr.mxu0 0.0
        %1805 = vmatpush2.msra.mxu0 0.0
        %1806 = vmatprep.subr.mxu0 0.0
        %1807 = vmatpush2.msra.mxu0 0.0
        %1808 = vmatprep.subr.mxu0 0.0
        %1809 = vmatpush2.msra.mxu0 0.0
        %1810 = vmatprep.subr.mxu0 0.0
        %1811 = vmatpush2.msra.mxu0 0.0
        %1812 = vmatprep.subr.mxu0 0.0
        %1813 = vmatpush2.msra.mxu0 0.0
        %1814 = vmatprep.subr.mxu0 0.0
        %1815 = vmatpush2.msra.mxu0 0.0
        %1816 = vmatprep.subr.mxu0 0.0
        %1817 = vmatpush2.msra.mxu0 0.0
        %1818 = vmatprep.subr.mxu0 0.0
        %1819 = vmatpush2.msra.mxu0 0.0
        %1820 = vmatprep.mubr.f32.mxu0 0.0
        %1821 = vmatmul.mubr.f32.gmra.mxu0 %v1720
        %v1822 = vpop.f32.mrf.mxu0
        %v1823 = vadd.f32 %v1669, %v1822
        %v1824 = vpop.f32.mrf.mxu0
        %1825 = vmatprep.mubr.f32.mxu0 0.0
        %1826 = vmatmul.mubr.f32.gmra.mxu0 %v1722
        %v1827 = vpop.f32.mrf.mxu0
        %v1828 = vadd.f32 %v1669, %v1827
        %v1829 = vpop.f32.mrf.mxu0
        %1830 = vmatprep.mubr.f32.mxu0 0.0
        %1831 = vmatmul.mubr.f32.gmra.mxu0 %v1724
        %v1832 = vpop.f32.mrf.mxu0
        %v1833 = vadd.f32 %v1669, %v1832
        %v1834 = vpop.f32.mrf.mxu0
        %1835 = vmatprep.mubr.f32.mxu0 0.0
        %1836 = vmatmul.mubr.f32.gmra.mxu0 %v1726
        %v1837 = vpop.f32.mrf.mxu0
        %v1838 = vadd.f32 %v1669, %v1837
        %v1839 = vpop.f32.mrf.mxu0
        %1840 = vmatprep.mubr.f32.mxu0 0.0
        %1841 = vmatmul.mubr.f32.gmra.mxu0 %v1728
        %v1842 = vpop.f32.mrf.mxu0
        %v1843 = vadd.f32 %v1669, %v1842
        %v1844 = vpop.f32.mrf.mxu0
        %1845 = vmatprep.mubr.f32.mxu0 0.0
        %1846 = vmatmul.mubr.f32.gmra.mxu0 %v1730
        %v1847 = vpop.f32.mrf.mxu0
        %v1848 = vadd.f32 %v1669, %v1847
        %v1849 = vpop.f32.mrf.mxu0
        %1850 = vmatprep.mubr.f32.mxu0 0.0
        %1851 = vmatmul.mubr.f32.gmra.mxu0 %v1732
        %v1852 = vpop.f32.mrf.mxu0
        %v1853 = vadd.f32 %v1669, %v1852
        %v1854 = vpop.f32.mrf.mxu0
        %1855 = vmatprep.mubr.f32.mxu0 0.0
        %1856 = vmatmul.mubr.f32.gmra.mxu0 %v1734
        %v1857 = vpop.f32.mrf.mxu0
        %v1858 = vadd.f32 %v1669, %v1857
        %v1859 = vpop.f32.mrf.mxu0
        %1860 = vmatprep.mubr.f32.mxu0 0.0
        %1861 = vmatmul.mubr.f32.gmra.mxu0 %v1736
        %v1862 = vpop.f32.mrf.mxu0
        %v1863 = vadd.f32 %v1669, %v1862
        %v1864 = vpop.f32.mrf.mxu0
        %1865 = vmatprep.mubr.f32.mxu0 0.0
        %1866 = vmatmul.mubr.f32.gmra.mxu0 %v1738
        %v1867 = vpop.f32.mrf.mxu0
        %v1868 = vadd.f32 %v1669, %v1867
        %v1869 = vpop.f32.mrf.mxu0
        %1870 = vmatprep.mubr.f32.mxu0 0.0
        %1871 = vmatmul.mubr.f32.gmra.mxu0 %v1740
        %v1872 = vpop.f32.mrf.mxu0
        %v1873 = vadd.f32 %v1669, %v1872
        %v1874 = vpop.f32.mrf.mxu0
        %1875 = vmatprep.mubr.f32.mxu0 0.0
        %1876 = vmatmul.mubr.f32.gmra.mxu0 %v1742
        %v1877 = vpop.f32.mrf.mxu0
        %v1878 = vadd.f32 %v1669, %v1877
        %v1879 = vpop.f32.mrf.mxu0
        %1880 = vmatprep.mubr.f32.mxu0 0.0
        %1881 = vmatmul.mubr.f32.gmra.mxu0 %v1744
        %v1882 = vpop.f32.mrf.mxu0
        %v1883 = vadd.f32 %v1669, %v1882
        %v1884 = vpop.f32.mrf.mxu0
        %1885 = vmatprep.mubr.f32.mxu0 0.0
        %1886 = vmatmul.mubr.f32.gmra.mxu0 %v1746
        %v1887 = vpop.f32.mrf.mxu0
        %v1888 = vadd.f32 %v1669, %v1887
        %v1889 = vpop.f32.mrf.mxu0
        %1890 = vmatprep.mubr.f32.mxu0 0.0
        %1891 = vmatmul.mubr.f32.gmra.mxu0 %v1748
        %v1892 = vpop.f32.mrf.mxu0
        %v1893 = vadd.f32 %v1669, %v1892
        %v1894 = vpop.f32.mrf.mxu0
        %1895 = vmatprep.mubr.f32.mxu0 0.0
        %1896 = vmatmul.mubr.f32.gmra.mxu0 %v1750
        %v1897 = vpop.f32.mrf.mxu0
        %v1898 = vadd.f32 %v1669, %v1897
        %v1899 = vpop.f32.mrf.mxu0
        %1900 = vdwg.mxu0
        %v1901 = vmax.f32 %v1823, 0.0
        %v1902 = vmax.f32 %v1828, 0.0
        %v1903 = vmax.f32 %v1833, 0.0
        %v1904 = vmax.f32 %v1838, 0.0
        %v1905 = vmax.f32 %v1843, 0.0
        %v1906 = vmax.f32 %v1848, 0.0
        %v1907 = vmax.f32 %v1853, 0.0
        %v1908 = vmax.f32 %v1858, 0.0
        %v1909 = vmax.f32 %v1863, 0.0
        %v1910 = vmax.f32 %v1868, 0.0
        %v1911 = vmax.f32 %v1873, 0.0
        %v1912 = vmax.f32 %v1878, 0.0
        %v1913 = vmax.f32 %v1883, 0.0
        %v1914 = vmax.f32 %v1888, 0.0
        %v1915 = vmax.f32 %v1893, 0.0
        %v1916 = vmax.f32 %v1898, 0.0
        %v1917 = vld [vmem:[#allocation14] sm:$0xff]
        %v1918 = vld [vmem:[#allocation14 + $0x8] sm:$0xff]
        %v1919 = vld [vmem:[#allocation16] sm:$0x1]
        %v1921 = vlaneseq
        %v1922 = vshrl.u32 %v1921, 7
        %v1923 = vsub.s32 0, %v1922
        %v1924 = vrot.slane %v1919, %v1923
        %v1927 = vsel %vm589, %v1901, 0
        %v1930 = vsel %vm589, %v1902, 0
        %v1933 = vsel %vm589, %v1903, 0
        %v1936 = vsel %vm589, %v1904, 0
        %v1939 = vsel %vm589, %v1905, 0
        %v1942 = vsel %vm589, %v1906, 0
        %v1945 = vsel %vm589, %v1907, 0
        %v1948 = vsel %vm589, %v1908, 0
        %v1951 = vsel %vm589, %v1909, 0
        %v1954 = vsel %vm589, %v1910, 0
        %v1957 = vsel %vm589, %v1911, 0
        %v1960 = vsel %vm589, %v1912, 0
        %v1963 = vsel %vm589, %v1913, 0
        %v1966 = vsel %vm589, %v1914, 0
        %v1969 = vsel %vm589, %v1915, 0
        %v1972 = vsel %vm589, %v1916, 0
        %1974 = vmatprep.subr.mxu0 0.0
        %1975 = vmatpush1.msra.mxu0 0.0
        %1976 = vmatprep.subr.mxu0 0.0
        %1977 = vmatpush1.msra.mxu0 0.0
        %1978 = vmatprep.subr.mxu0 0.0
        %1979 = vmatpush1.msra.mxu0 0.0
        %1980 = vmatprep.subr.mxu0 0.0
        %1981 = vmatpush1.msra.mxu0 0.0
        %1982 = vmatprep.subr.mxu0 0.0
        %1983 = vmatpush1.msra.mxu0 0.0
        %1984 = vmatprep.subr.mxu0 0.0
        %1985 = vmatpush1.msra.mxu0 0.0
        %1986 = vmatprep.subr.mxu0 0.0
        %1987 = vmatpush1.msra.mxu0 0.0
        %1988 = vmatprep.subr.mxu0 0.0
        %1989 = vmatpush1.msra.mxu0 0.0
        %1990 = vmatprep.subr.mxu0 0.0
        %1991 = vmatpush1.msra.mxu0 0.0
        %1992 = vmatprep.subr.mxu0 0.0
        %1993 = vmatpush1.msra.mxu0 0.0
        %1994 = vmatprep.subr.mxu0 0.0
        %1995 = vmatpush1.msra.mxu0 0.0
        %1996 = vmatprep.subr.mxu0 0.0
        %1997 = vmatpush1.msra.mxu0 0.0
        %1998 = vmatprep.subr.mxu0 0.0
        %1999 = vmatpush1.msra.mxu0 0.0
        %2000 = vmatprep.subr.mxu0 0.0
        %2001 = vmatpush1.msra.mxu0 0.0
        %2002 = vmatprep.subr.mxu0 0.0
        %2003 = vmatpush1.msra.mxu0 %v1918
        %2004 = vmatprep.subr.mxu0 0.0
        %2005 = vmatpush1.msra.mxu0 %v1917
        %2006 = vmatprep.subr.mxu0 0.0
        %2007 = vmatpush2.msra.mxu0 0.0
        %2008 = vmatprep.subr.mxu0 0.0
        %2009 = vmatpush2.msra.mxu0 0.0
        %2010 = vmatprep.subr.mxu0 0.0
        %2011 = vmatpush2.msra.mxu0 0.0
        %2012 = vmatprep.subr.mxu0 0.0
        %2013 = vmatpush2.msra.mxu0 0.0
        %2014 = vmatprep.subr.mxu0 0.0
        %2015 = vmatpush2.msra.mxu0 0.0
        %2016 = vmatprep.subr.mxu0 0.0
        %2017 = vmatpush2.msra.mxu0 0.0
        %2018 = vmatprep.subr.mxu0 0.0
        %2019 = vmatpush2.msra.mxu0 0.0
        %2020 = vmatprep.subr.mxu0 0.0
        %2021 = vmatpush2.msra.mxu0 0.0
        %2022 = vmatprep.subr.mxu0 0.0
        %2023 = vmatpush2.msra.mxu0 0.0
        %2024 = vmatprep.subr.mxu0 0.0
        %2025 = vmatpush2.msra.mxu0 0.0
        %2026 = vmatprep.subr.mxu0 0.0
        %2027 = vmatpush2.msra.mxu0 0.0
        %2028 = vmatprep.subr.mxu0 0.0
        %2029 = vmatpush2.msra.mxu0 0.0
        %2030 = vmatprep.subr.mxu0 0.0
        %2031 = vmatpush2.msra.mxu0 0.0
        %2032 = vmatprep.subr.mxu0 0.0
        %2033 = vmatpush2.msra.mxu0 0.0
        %2034 = vmatprep.subr.mxu0 0.0
        %2035 = vmatpush2.msra.mxu0 0.0
        %2036 = vmatprep.subr.mxu0 0.0
        %2037 = vmatpush2.msra.mxu0 0.0
        %2038 = vmatprep.mubr.f32.mxu0 0.0
        %2039 = vmatmul.mubr.f32.gmra.mxu0 %v1927
        %v2040 = vpop.f32.mrf.mxu0
        %v2041 = vadd.f32 %v1924, %v2040
        %v2042 = vpop.f32.mrf.mxu0
        %2043 = vmatprep.mubr.f32.mxu0 0.0
        %2044 = vmatmul.mubr.f32.gmra.mxu0 %v1930
        %v2045 = vpop.f32.mrf.mxu0
        %v2046 = vadd.f32 %v1924, %v2045
        %v2047 = vpop.f32.mrf.mxu0
        %2048 = vmatprep.mubr.f32.mxu0 0.0
        %2049 = vmatmul.mubr.f32.gmra.mxu0 %v1933
        %v2050 = vpop.f32.mrf.mxu0
        %v2051 = vadd.f32 %v1924, %v2050
        %v2052 = vpop.f32.mrf.mxu0
        %2053 = vmatprep.mubr.f32.mxu0 0.0
        %2054 = vmatmul.mubr.f32.gmra.mxu0 %v1936
        %v2055 = vpop.f32.mrf.mxu0
        %v2056 = vadd.f32 %v1924, %v2055
        %v2057 = vpop.f32.mrf.mxu0
        %2058 = vmatprep.mubr.f32.mxu0 0.0
        %2059 = vmatmul.mubr.f32.gmra.mxu0 %v1939
        %v2060 = vpop.f32.mrf.mxu0
        %v2061 = vadd.f32 %v1924, %v2060
        %v2062 = vpop.f32.mrf.mxu0
        %2063 = vmatprep.mubr.f32.mxu0 0.0
        %2064 = vmatmul.mubr.f32.gmra.mxu0 %v1942
        %v2065 = vpop.f32.mrf.mxu0
        %v2066 = vadd.f32 %v1924, %v2065
        %v2067 = vpop.f32.mrf.mxu0
        %2068 = vmatprep.mubr.f32.mxu0 0.0
        %2069 = vmatmul.mubr.f32.gmra.mxu0 %v1945
        %v2070 = vpop.f32.mrf.mxu0
        %v2071 = vadd.f32 %v1924, %v2070
        %v2072 = vpop.f32.mrf.mxu0
        %2073 = vmatprep.mubr.f32.mxu0 0.0
        %2074 = vmatmul.mubr.f32.gmra.mxu0 %v1948
        %v2075 = vpop.f32.mrf.mxu0
        %v2076 = vadd.f32 %v1924, %v2075
        %v2077 = vpop.f32.mrf.mxu0
        %2078 = vmatprep.mubr.f32.mxu0 0.0
        %2079 = vmatmul.mubr.f32.gmra.mxu0 %v1951
        %v2080 = vpop.f32.mrf.mxu0
        %v2081 = vadd.f32 %v1924, %v2080
        %v2082 = vpop.f32.mrf.mxu0
        %2083 = vmatprep.mubr.f32.mxu0 0.0
        %2084 = vmatmul.mubr.f32.gmra.mxu0 %v1954
        %v2085 = vpop.f32.mrf.mxu0
        %v2086 = vadd.f32 %v1924, %v2085
        %v2087 = vpop.f32.mrf.mxu0
        %2088 = vmatprep.mubr.f32.mxu0 0.0
        %2089 = vmatmul.mubr.f32.gmra.mxu0 %v1957
        %v2090 = vpop.f32.mrf.mxu0
        %v2091 = vadd.f32 %v1924, %v2090
        %v2092 = vpop.f32.mrf.mxu0
        %2093 = vmatprep.mubr.f32.mxu0 0.0
        %2094 = vmatmul.mubr.f32.gmra.mxu0 %v1960
        %v2095 = vpop.f32.mrf.mxu0
        %v2096 = vadd.f32 %v1924, %v2095
        %v2097 = vpop.f32.mrf.mxu0
        %2098 = vmatprep.mubr.f32.mxu0 0.0
        %2099 = vmatmul.mubr.f32.gmra.mxu0 %v1963
        %v2100 = vpop.f32.mrf.mxu0
        %v2101 = vadd.f32 %v1924, %v2100
        %v2102 = vpop.f32.mrf.mxu0
        %2103 = vmatprep.mubr.f32.mxu0 0.0
        %2104 = vmatmul.mubr.f32.gmra.mxu0 %v1966
        %v2105 = vpop.f32.mrf.mxu0
        %v2106 = vadd.f32 %v1924, %v2105
        %v2107 = vpop.f32.mrf.mxu0
        %2108 = vmatprep.mubr.f32.mxu0 0.0
        %2109 = vmatmul.mubr.f32.gmra.mxu0 %v1969
        %v2110 = vpop.f32.mrf.mxu0
        %v2111 = vadd.f32 %v1924, %v2110
        %v2112 = vpop.f32.mrf.mxu0
        %2113 = vmatprep.mubr.f32.mxu0 0.0
        %2114 = vmatmul.mubr.f32.gmra.mxu0 %v1972
        %v2115 = vpop.f32.mrf.mxu0
        %v2116 = vadd.f32 %v1924, %v2115
        %v2117 = vpop.f32.mrf.mxu0
        %2118 = vdwg.mxu0
        %v2119 = vxor.u32 %v2041, 2147483648
        %v2120 = vxor.u32 %v2046, 2147483648
        %v2121 = vxor.u32 %v2051, 2147483648
        %v2122 = vxor.u32 %v2056, 2147483648
        %v2123 = vxor.u32 %v2061, 2147483648
        %v2124 = vxor.u32 %v2066, 2147483648
        %v2125 = vxor.u32 %v2071, 2147483648
        %v2126 = vxor.u32 %v2076, 2147483648
        %v2127 = vxor.u32 %v2081, 2147483648
        %v2128 = vxor.u32 %v2086, 2147483648
        %v2129 = vxor.u32 %v2091, 2147483648
        %v2130 = vxor.u32 %v2096, 2147483648
        %v2131 = vxor.u32 %v2101, 2147483648
        %v2132 = vxor.u32 %v2106, 2147483648
        %v2133 = vxor.u32 %v2111, 2147483648
        %v2134 = vxor.u32 %v2116, 2147483648
        %v2135 = vmul.f32 %v2119, 1.442695
        %v2136 = vpow.pop %v2135
        %v2137 = vmul.f32 %v2120, 1.442695
        %v2138 = vpow.pop %v2137
        %v2139 = vmul.f32 %v2121, 1.442695
        %v2140 = vpow.pop %v2139
        %v2141 = vmul.f32 %v2122, 1.442695
        %v2142 = vpow.pop %v2141
        %v2143 = vmul.f32 %v2123, 1.442695
        %v2144 = vpow.pop %v2143
        %v2145 = vmul.f32 %v2124, 1.442695
        %v2146 = vpow.pop %v2145
        %v2147 = vmul.f32 %v2125, 1.442695
        %v2148 = vpow.pop %v2147
        %v2149 = vmul.f32 %v2126, 1.442695
        %v2150 = vpow.pop %v2149
        %v2151 = vmul.f32 %v2127, 1.442695
        %v2152 = vpow.pop %v2151
        %v2153 = vmul.f32 %v2128, 1.442695
        %v2154 = vpow.pop %v2153
        %v2155 = vmul.f32 %v2129, 1.442695
        %v2156 = vpow.pop %v2155
        %v2157 = vmul.f32 %v2130, 1.442695
        %v2158 = vpow.pop %v2157
        %v2159 = vmul.f32 %v2131, 1.442695
        %v2160 = vpow.pop %v2159
        %v2161 = vmul.f32 %v2132, 1.442695
        %v2162 = vpow.pop %v2161
        %v2163 = vmul.f32 %v2133, 1.442695
        %v2164 = vpow.pop %v2163
        %v2165 = vmul.f32 %v2134, 1.442695
        %v2166 = vpow.pop %v2165
        %v2167 = vadd.f32 %v2136, 1.0
        %v2168 = vadd.f32 %v2138, 1.0
        %v2169 = vadd.f32 %v2140, 1.0
        %v2170 = vadd.f32 %v2142, 1.0
        %v2171 = vadd.f32 %v2144, 1.0
        %v2172 = vadd.f32 %v2146, 1.0
        %v2173 = vadd.f32 %v2148, 1.0
        %v2174 = vadd.f32 %v2150, 1.0
        %v2175 = vadd.f32 %v2152, 1.0
        %v2176 = vadd.f32 %v2154, 1.0
        %v2177 = vadd.f32 %v2156, 1.0
        %v2178 = vadd.f32 %v2158, 1.0
        %v2179 = vadd.f32 %v2160, 1.0
        %v2180 = vadd.f32 %v2162, 1.0
        %v2181 = vadd.f32 %v2164, 1.0
        %v2182 = vadd.f32 %v2166, 1.0
        %v2183 = vrcp.pop %v2167
        %v2184 = vmul.f32 1.0, %v2183
        %v2185 = vrcp.pop %v2168
        %v2186 = vmul.f32 1.0, %v2185
        %v2187 = vrcp.pop %v2169
        %v2188 = vmul.f32 1.0, %v2187
        %v2189 = vrcp.pop %v2170
        %v2190 = vmul.f32 1.0, %v2189
        %v2191 = vrcp.pop %v2171
        %v2192 = vmul.f32 1.0, %v2191
        %v2193 = vrcp.pop %v2172
        %v2194 = vmul.f32 1.0, %v2193
        %v2195 = vrcp.pop %v2173
        %v2196 = vmul.f32 1.0, %v2195
        %v2197 = vrcp.pop %v2174
        %v2198 = vmul.f32 1.0, %v2197
        %v2199 = vrcp.pop %v2175
        %v2200 = vmul.f32 1.0, %v2199
        %v2201 = vrcp.pop %v2176
        %v2202 = vmul.f32 1.0, %v2201
        %v2203 = vrcp.pop %v2177
        %v2204 = vmul.f32 1.0, %v2203
        %v2205 = vrcp.pop %v2178
        %v2206 = vmul.f32 1.0, %v2205
        %v2207 = vrcp.pop %v2179
        %v2208 = vmul.f32 1.0, %v2207
        %v2209 = vrcp.pop %v2180
        %v2210 = vmul.f32 1.0, %v2209
        %v2211 = vrcp.pop %v2181
        %v2212 = vmul.f32 1.0, %v2211
        %v2213 = vrcp.pop %v2182
        %v2214 = vmul.f32 1.0, %v2213
        %2215 = vst.msk [vmem:[%s578] sm:$0xff] %vm589, %v2184
        %2216 = vst.msk [vmem:[%s578 + $0x8] sm:$0xff] %vm589, %v2186
        %2217 = vst.msk [vmem:[%s578 + $0x10] sm:$0xff] %vm589, %v2188
        %2218 = vst.msk [vmem:[%s578 + $0x18] sm:$0xff] %vm589, %v2190
        %2219 = vst.msk [vmem:[%s578 + $0x20] sm:$0xff] %vm589, %v2192
        %2220 = vst.msk [vmem:[%s578 + $0x28] sm:$0xff] %vm589, %v2194
        %2221 = vst.msk [vmem:[%s578 + $0x30] sm:$0xff] %vm589, %v2196
        %2222 = vst.msk [vmem:[%s578 + $0x38] sm:$0xff] %vm589, %v2198
        %2223 = vst.msk [vmem:[%s578 + $0x40] sm:$0xff] %vm589, %v2200
        %2224 = vst.msk [vmem:[%s578 + $0x48] sm:$0xff] %vm589, %v2202
        %2225 = vst.msk [vmem:[%s578 + $0x50] sm:$0xff] %vm589, %v2204
        %2226 = vst.msk [vmem:[%s578 + $0x58] sm:$0xff] %vm589, %v2206
        %2227 = vst.msk [vmem:[%s578 + $0x60] sm:$0xff] %vm589, %v2208
        %2228 = vst.msk [vmem:[%s578 + $0x68] sm:$0xff] %vm589, %v2210
        %2229 = vst.msk [vmem:[%s578 + $0x70] sm:$0xff] %vm589, %v2212
        %2230 = vst.msk [vmem:[%s578 + $0x78] sm:$0xff] %vm589, %v2214
        %s2231 = smul.u32 8, %s34
        %p2232 = scmp.lt.s32.totalorder %s33, 1
        %s2233 = scalar_select %p2232, %s33, 1
        %p2234 = scmp.lt.s32.totalorder %s2231, 15
        %s2235 = scalar_select %p2234, %s2231, 15
        %s2236 = smul.addr %s2235, 2
        %s2237 = smul.addr %s2233, 32
        %s2238 = sadd.s32 %s2236, %s2237
        %s2239 = smul.addr %s2238, 8
        %s2240 = scalar_lea.vmem %s9, %s2239
        // Predicated region
        $region93: #{db_head_forward.1} parent=55 // pred_check
          %p2241 = pneg %p287
        $region94: #{db_head_forward.1} parent=55 // pred_check_branch
          %2243 = sbr.rel (%p2241) target = $region96
        $region95: #{db_head_forward.1} parent=55 // pred_region
          %s2244 = smul.u32 8, %s34
        $region96: #{db_head_forward.1} parent=55 // pred_fallthru
          _
      $region56: #{db_head_forward.1} parent=5 // pred_fallthru
        _
      %p2245 = scmp.le.s32.totalorder 2, %s24
      // Predicated region
      $region97: #{db_head_forward.1} parent=5 // pred_check
        %p2246 = pneg %p2245
      $region98: #{db_head_forward.1} parent=5 // pred_check_branch
        %2248 = sbr.rel (%p2246) target = $region100
      $region99: #{db_head_forward.1} parent=5 // pred_region
        %s2249 = ssub.s32 %s24, 2
        // Predicated region
        $region101: #{db_head_forward.1} parent=99 // pred_check
          %p2250 = pneg %p293
        $region102: #{db_head_forward.1} parent=99 // pred_check_branch
          %2252 = sbr.rel (%p2250) target = $region104
        $region103: #{db_head_forward.1} parent=99 // pred_region
          %s2253 = smul.u32 8, %s36
          %p2254 = scmp.lt.s32.totalorder %s35, 1
          %s2255 = scalar_select %p2254, %s35, 1
          %p2256 = scmp.lt.s32.totalorder %s2253, 15
          %s2257 = scalar_select %p2256, %s2253, 15
          %s2258 = smul.addr %s2257, 2
          %s2259 = smul.addr %s2255, 32
          %s2260 = sadd.s32 %s2258, %s2259
          %s2261 = smul.addr %s2260, 8
          %s2262 = scalar_lea.vmem %s9, %s2261
        $region104: #{db_head_forward.1} parent=99 // pred_fallthru
          _
      $region100: #{db_head_forward.1} parent=5 // pred_fallthru
        _
    $region6: #{db_head_forward.1} parent=1 // loop_footer
      %s28 = sadd.s32 1, %s24
    $region7: #{db_head_forward.1} parent=1 // loop_footer_branch
      %23 = sbr.rel target = $region3
    $region8: #{db_head_forward.1} parent=1 // loop_exit
      _
    %2263 = vsyncpa [#allocation4], 1
    %s2264 = scalar_lea.sflag [#allocation4], 1
    %2265 = vsyncpa %s2264, 1
    %2266 = vsyncpa [#allocation6], 1
    %s2267 = scalar_lea.sflag [#allocation6], 1
    %2268 = vsyncpa %s2267, 1
    %2269 = vsyncpa [#allocation9], 1
    %2270 = vsyncpa [#allocation12], 1
    %2271 = vsyncpa [#allocation15], 1

</llo_original>
